<compile_context>
chip_gen: v6e
topology: v6e:2x2x1
jax: 0.10.0
libtpu: 0.0.40
codegen_flags: <defaults>
</compile_context>

<pallas_src>
import jax
import jax.numpy as jnp
from jax.experimental import pallas as pl
from jax.experimental.pallas import tpu as pltpu

LANE = 128
SUBLANE = 8


def _round_up(v, m):
    return (v + m - 1) // m * m


# ---------------------------------------------------------------------------
# Kernel: one graph per grid step, whole layer stack fused, all matmuls on MXU.
# ---------------------------------------------------------------------------
def _net_kernel(a_ref, x_ref, w_ref, b_ref, o_ref):
    cdt = w_ref.dtype                     # MXU operand dtype (f32 or bf16)
    a = a_ref[0]                          # (Np, Np), already in cdt
    y = x_ref[0].astype(jnp.float32)      # (Np, D) running activations in f32

    def mxu(u, v):
        return jnp.dot(u, v, preferred_element_type=jnp.float32)

    def gcn(y_in, i):
        xw = mxu(y_in.astype(cdt), w_ref[i])       # (Np, D) f32 accumulate
        agg = mxu(a, xw.astype(cdt))               # (Np, D) f32 accumulate
        return jnp.maximum(agg + b_ref[i], 0.0)    # bias+ReLU in f32 on the VPU

    y = gcn(y, 0)                                  # conv1 + relu
    y = gcn(y, 1)                                  # conv2 + relu
    y = gcn(y, 2)                                  # conv3 + relu
    y = jnp.maximum(mxu(y.astype(cdt), w_ref[3]) + b_ref[3], 0.0)   # fc1 + relu
    y = jnp.maximum(mxu(y.astype(cdt), w_ref[4]) + b_ref[4], 0.0)   # fc2 + relu
    y = mxu(y.astype(cdt), w_ref[5]) + b_ref[5]                     # fc3 (no relu)

    o_ref[0] = y.astype(o_ref.dtype)               # lane-dense (Np, 128) store


# ---------------------------------------------------------------------------
# Parameter packing (done once): 12 tiny arrays -> 2 contiguous, lane-dense slabs.
# ---------------------------------------------------------------------------
def pack_params(params):
    dims = [params["w1"].shape[0]]
    for k in ("w1", "w2", "w3", "wf1", "wf2", "wf3"):
        dims.append(params[k].shape[1])
    d = _round_up(max(dims), LANE)

    def pad_w(w):
        return jnp.zeros((d, d), jnp.float32).at[: w.shape[0], : w.shape[1]].set(w)

    def pad_b(b):
        return jnp.zeros((1, d), jnp.float32).at[:, : b.shape[1]].set(b)

    w_slab = jnp.stack([pad_w(params[k]) for k in ("w1", "w2", "w3", "wf1", "wf2", "wf3")])
    b_slab = jnp.stack([pad_b(params[k]) for k in ("b1", "b2", "b3", "bf1", "bf2", "bf3")])
    return w_slab, b_slab, d


# ---------------------------------------------------------------------------
# Wrapper: batched graphs on a parallel grid axis, padded/lane-dense layout.
# ---------------------------------------------------------------------------
def net_forward(a_hat, x, w_slab, b_slab, num_classes, *, use_bf16=False):
    """a_hat: (G, N, N) normalized adjacency; x: (G, N, F) node features."""
    g, n, f = x.shape
    d = w_slab.shape[-1]
    npad = _round_up(n, SUBLANE)

    # Zero-pad once in the wrapper (semantics-preserving); kernel sees dense tiles.
    xp = jnp.zeros((g, npad, d), jnp.float32).at[:, :n, :f].set(x)
    ap = jnp.zeros((g, npad, npad), jnp.float32).at[:, :n, :n].set(a_hat)

    cdt = jnp.bfloat16 if use_bf16 else jnp.float32
    ap = ap.astype(cdt)
    xp = xp.astype(cdt)
    ws = w_slab.astype(cdt)
    bs = b_slab  # biases stay f32 (VPU work stays f32 on every generation)

    flops = g * (6 * 2 * npad * d * d + 3 * 2 * npad * npad * d)
    bytes_accessed = int(
        ap.size * ap.dtype.itemsize
        + xp.size * xp.dtype.itemsize
        + ws.size * ws.dtype.itemsize
        + bs.size * bs.dtype.itemsize
        + g * npad * d * 4
    )

    out = pl.pallas_call(
        _net_kernel,
        out_shape=jax.ShapeDtypeStruct((g, npad, d), jnp.float32),
        grid=(g,),
        in_specs=[
            pl.BlockSpec((1, npad, npad), lambda i: (i, 0, 0)),   # per-graph A_hat
            pl.BlockSpec((1, npad, d), lambda i: (i, 0, 0)),      # per-graph features
            pl.BlockSpec((6, d, d), lambda i: (0, 0, 0)),         # weight slab, resident
            pl.BlockSpec((6, 1, d), lambda i: (0, 0, 0)),         # bias slab, resident
        ],
        out_specs=pl.BlockSpec((1, npad, d), lambda i: (i, 0, 0)),
        compiler_params=pltpu.CompilerParams(dimension_semantics=("parallel",)),
        cost_estimate=pl.CostEstimate(
            flops=flops, transcendentals=0, bytes_accessed=bytes_accessed
        ),
    )(ap, xp, ws, bs)

    return out[:, :n, :num_classes]


# ---------------------------------------------------------------------------
# Plain-JAX glue + reference.
# ---------------------------------------------------------------------------
def build_normalized_adjacency(edge_index, num_nodes):
    """Dense GCN-normalized adjacency A_hat = D^-1/2 (A + I) D^-1/2."""
    src, dst = edge_index
    a = jnp.zeros((num_nodes, num_nodes), jnp.float32).at[dst, src].set(1.0)
    diag = jnp.arange(num_nodes)
    a = a.at[diag, diag].set(1.0)  # add_remaining_self_loops-style: diagonal weight 1
    deg = a.sum(axis=1)
    d_inv_sqrt = jnp.where(deg > 0, jax.lax.rsqrt(deg), 0.0)
    return d_inv_sqrt[:, None] * a * d_inv_sqrt[None, :]


def init_params(key, n_features, num_hidden, num_classes):
    ks = jax.random.split(key, 12)
    s = lambda fan_in: 1.0 / jnp.sqrt(jnp.float32(fan_in))
    return {
        "w1": jax.random.uniform(ks[0], (n_features, num_hidden), jnp.float32, -s(n_features), s(n_features)),
        "b1": jnp.zeros((1, num_hidden), jnp.float32),
        "w2": jax.random.uniform(ks[1], (num_hidden, num_hidden), jnp.float32, -s(num_hidden), s(num_hidden)),
        "b2": jnp.zeros((1, num_hidden), jnp.float32),
        "w3": jax.random.uniform(ks[2], (num_hidden, num_hidden), jnp.float32, -s(num_hidden), s(num_hidden)),
        "b3": jnp.zeros((1, num_hidden), jnp.float32),
        "wf1": jax.random.uniform(ks[3], (num_hidden, num_hidden), jnp.float32, -s(num_hidden), s(num_hidden)),
        "bf1": jax.random.uniform(ks[4], (1, num_hidden), jnp.float32, -s(num_hidden), s(num_hidden)),
        "wf2": jax.random.uniform(ks[5], (num_hidden, num_hidden), jnp.float32, -s(num_hidden), s(num_hidden)),
        "bf2": jax.random.uniform(ks[6], (1, num_hidden), jnp.float32, -s(num_hidden), s(num_hidden)),
        "wf3": jax.random.uniform(ks[7], (num_hidden, num_classes), jnp.float32, -s(num_hidden), s(num_hidden)),
        "bf3": jax.random.uniform(ks[8], (1, num_classes), jnp.float32, -s(num_hidden), s(num_hidden)),
    }


def reference_forward(a_hat, x, p):
    relu = lambda v: jnp.maximum(v, 0.0)
    y = relu(a_hat @ (x @ p["w1"]) + p["b1"])
    y = relu(a_hat @ (y @ p["w2"]) + p["b2"])
    y = relu(a_hat @ (y @ p["w3"]) + p["b3"])
    y = relu(y @ p["wf1"] + p["bf1"])
    y = relu(y @ p["wf2"] + p["bf2"])
    return y @ p["wf3"] + p["bf3"]


if __name__ == "__main__":
    key = jax.random.PRNGKey(0)
    k_feat, k_edge, k_param = jax.random.split(key, 3)

    num_graphs = 4          # small synthetic PPI-like batch of graphs
    num_nodes = 64
    n_features = 32
    num_hidden = 32
    num_classes = 16
    num_edges = 256

    feat_keys = jax.random.split(k_feat, num_graphs)
    edge_keys = jax.random.split(k_edge, num_graphs)
    xs = jnp.stack(
        [jax.random.normal(k, (num_nodes, n_features), jnp.float32) for k in feat_keys]
    )
    a_hats = jnp.stack(
        [
            build_normalized_adjacency(
                jax.random.randint(k, (2, num_edges), 0, num_nodes), num_nodes
            )
            for k in edge_keys
        ]
    )

    params = init_params(k_param, n_features, num_hidden, num_classes)
    w_slab, b_slab, _ = pack_params(params)

    # f32 MXU path (exact semantics).
    out = net_forward(a_hats, xs, w_slab, b_slab, num_classes)
    out = jax.block_until_ready(out)

    ref = jax.vmap(lambda a, x: reference_forward(a, x, params))(a_hats, xs)
    assert out.shape == (num_graphs, num_nodes, num_classes)
    assert jnp.allclose(out, ref, atol=1e-4, rtol=1e-4)

    # bf16 MXU-input path (v6e/v7x optimization): f32 accumulation, looser tolerance.
    out_bf16 = jax.block_until_ready(
        net_forward(a_hats, xs, w_slab, b_slab, num_classes, use_bf16=True)
    )
    rel_err = jnp.max(jnp.abs(out_bf16 - ref)) / (jnp.max(jnp.abs(ref)) + 1e-6)
    assert out_bf16.shape == (num_graphs, num_nodes, num_classes)
    assert rel_err < 1e-1

    print("KERNEL_OK")
</pallas_src>

<mosaic_0001>
module attributes {stable_mosaic.version = 11 : i64} {
  func.func @_net_kernel(%arg0: i32, %arg1: memref<1x64x64xf32, #tpu.memory_space<vmem>>, %arg2: memref<1x64x128xf32, #tpu.memory_space<vmem>>, %arg3: memref<6x128x128xf32, #tpu.memory_space<vmem>>, %arg4: memref<6x1x128xf32, #tpu.memory_space<vmem>>, %arg5: memref<1x64x128xf32, #tpu.memory_space<vmem>>) attributes {dimension_semantics = [#tpu.dimension_semantics<parallel>], iteration_bounds = array<i64: 4>, scalar_prefetch = 0 : i64, scratch_operands = 0 : i64, tpu.core_type = #tpu.core_type<tc>, window_params = [{transform_indices = @transform_0, window_bounds = array<i64: 1, 64, 64>}, {transform_indices = @transform_1, window_bounds = array<i64: 1, 64, 128>}, {pipeline_mode = #tpu.pipeline_mode<synchronous>, transform_indices = @transform_2, window_bounds = array<i64: 6, 128, 128>}, {pipeline_mode = #tpu.pipeline_mode<synchronous>, transform_indices = @transform_3, window_bounds = array<i64: 6, 1, 128>}, {transform_indices = @transform_4, window_bounds = array<i64: 1, 64, 128>}]} {
    %c0 = arith.constant 0 : index
    %c0_0 = arith.constant 0 : index
    %c0_1 = arith.constant 0 : index
    %0 = vector.load %arg1[%c0, %c0_0, %c0_1] : memref<1x64x64xf32, #tpu.memory_space<vmem>>, vector<1x64x64xf32>
    %1 = vector.shape_cast %0 : vector<1x64x64xf32> to vector<64x64xf32>
    %c0_2 = arith.constant 0 : index
    %c0_3 = arith.constant 0 : index
    %c0_4 = arith.constant 0 : index
    %2 = vector.load %arg2[%c0_2, %c0_3, %c0_4] : memref<1x64x128xf32, #tpu.memory_space<vmem>>, vector<1x64x128xf32>
    %3 = vector.shape_cast %2 : vector<1x64x128xf32> to vector<64x128xf32>
    %c0_5 = arith.constant 0 : index
    %c0_6 = arith.constant 0 : index
    %c0_7 = arith.constant 0 : index
    %4 = vector.load %arg3[%c0_5, %c0_6, %c0_7] : memref<6x128x128xf32, #tpu.memory_space<vmem>>, vector<1x128x128xf32>
    %5 = vector.shape_cast %4 : vector<1x128x128xf32> to vector<128x128xf32>
    %cst = arith.constant dense<0.000000e+00> : vector<64x128xf32>
    %6 = tpu.matmul %3, %5, %cst {dimension_numbers = #tpu.dot_dimension_numbers<[1], [0], [0], [1], [0, 0, 1, 1], [], []>} : vector<64x128xf32>, vector<128x128xf32>, vector<64x128xf32> -> vector<64x128xf32>
    %cst_8 = arith.constant dense<0.000000e+00> : vector<64x128xf32>
    %7 = tpu.matmul %1, %6, %cst_8 {dimension_numbers = #tpu.dot_dimension_numbers<[1], [0], [0], [1], [0, 0, 1, 1], [], []>} : vector<64x64xf32>, vector<64x128xf32>, vector<64x128xf32> -> vector<64x128xf32>
    %c0_9 = arith.constant 0 : index
    %c0_10 = arith.constant 0 : index
    %c0_11 = arith.constant 0 : index
    %8 = vector.load %arg4[%c0_9, %c0_10, %c0_11] : memref<6x1x128xf32, #tpu.memory_space<vmem>>, vector<1x1x128xf32>
    %9 = vector.shape_cast %8 : vector<1x1x128xf32> to vector<1x128xf32>
    %10 = vector.broadcast %9 : vector<1x128xf32> to vector<64x128xf32>
    %11 = arith.addf %7, %10 : vector<64x128xf32>
    %cst_12 = arith.constant 0.000000e+00 : f32
    %12 = vector.broadcast %cst_12 : f32 to vector<64x128xf32>
    %13 = arith.maximumf %11, %12 : vector<64x128xf32>
    %c1 = arith.constant 1 : index
    %c0_13 = arith.constant 0 : index
    %c0_14 = arith.constant 0 : index
    %14 = vector.load %arg3[%c1, %c0_13, %c0_14] : memref<6x128x128xf32, #tpu.memory_space<vmem>>, vector<1x128x128xf32>
    %15 = vector.shape_cast %14 : vector<1x128x128xf32> to vector<128x128xf32>
    %cst_15 = arith.constant dense<0.000000e+00> : vector<64x128xf32>
    %16 = tpu.matmul %13, %15, %cst_15 {dimension_numbers = #tpu.dot_dimension_numbers<[1], [0], [0], [1], [0, 0, 1, 1], [], []>} : vector<64x128xf32>, vector<128x128xf32>, vector<64x128xf32> -> vector<64x128xf32>
    %cst_16 = arith.constant dense<0.000000e+00> : vector<64x128xf32>
    %17 = tpu.matmul %1, %16, %cst_16 {dimension_numbers = #tpu.dot_dimension_numbers<[1], [0], [0], [1], [0, 0, 1, 1], [], []>} : vector<64x64xf32>, vector<64x128xf32>, vector<64x128xf32> -> vector<64x128xf32>
    %c1_17 = arith.constant 1 : index
    %c0_18 = arith.constant 0 : index
    %c0_19 = arith.constant 0 : index
    %18 = vector.load %arg4[%c1_17, %c0_18, %c0_19] : memref<6x1x128xf32, #tpu.memory_space<vmem>>, vector<1x1x128xf32>
    %19 = vector.shape_cast %18 : vector<1x1x128xf32> to vector<1x128xf32>
    %20 = vector.broadcast %19 : vector<1x128xf32> to vector<64x128xf32>
    %21 = arith.addf %17, %20 : vector<64x128xf32>
    %cst_20 = arith.constant 0.000000e+00 : f32
    %22 = vector.broadcast %cst_20 : f32 to vector<64x128xf32>
    %23 = arith.maximumf %21, %22 : vector<64x128xf32>
    %c2 = arith.constant 2 : index
    %c0_21 = arith.constant 0 : index
    %c0_22 = arith.constant 0 : index
    %24 = vector.load %arg3[%c2, %c0_21, %c0_22] : memref<6x128x128xf32, #tpu.memory_space<vmem>>, vector<1x128x128xf32>
    %25 = vector.shape_cast %24 : vector<1x128x128xf32> to vector<128x128xf32>
    %cst_23 = arith.constant dense<0.000000e+00> : vector<64x128xf32>
    %26 = tpu.matmul %23, %25, %cst_23 {dimension_numbers = #tpu.dot_dimension_numbers<[1], [0], [0], [1], [0, 0, 1, 1], [], []>} : vector<64x128xf32>, vector<128x128xf32>, vector<64x128xf32> -> vector<64x128xf32>
    %cst_24 = arith.constant dense<0.000000e+00> : vector<64x128xf32>
    %27 = tpu.matmul %1, %26, %cst_24 {dimension_numbers = #tpu.dot_dimension_numbers<[1], [0], [0], [1], [0, 0, 1, 1], [], []>} : vector<64x64xf32>, vector<64x128xf32>, vector<64x128xf32> -> vector<64x128xf32>
    %c2_25 = arith.constant 2 : index
    %c0_26 = arith.constant 0 : index
    %c0_27 = arith.constant 0 : index
    %28 = vector.load %arg4[%c2_25, %c0_26, %c0_27] : memref<6x1x128xf32, #tpu.memory_space<vmem>>, vector<1x1x128xf32>
    %29 = vector.shape_cast %28 : vector<1x1x128xf32> to vector<1x128xf32>
    %30 = vector.broadcast %29 : vector<1x128xf32> to vector<64x128xf32>
    %31 = arith.addf %27, %30 : vector<64x128xf32>
    %cst_28 = arith.constant 0.000000e+00 : f32
    %32 = vector.broadcast %cst_28 : f32 to vector<64x128xf32>
    %33 = arith.maximumf %31, %32 : vector<64x128xf32>
    %c3 = arith.constant 3 : index
    %c0_29 = arith.constant 0 : index
    %c0_30 = arith.constant 0 : index
    %34 = vector.load %arg3[%c3, %c0_29, %c0_30] : memref<6x128x128xf32, #tpu.memory_space<vmem>>, vector<1x128x128xf32>
    %35 = vector.shape_cast %34 : vector<1x128x128xf32> to vector<128x128xf32>
    %cst_31 = arith.constant dense<0.000000e+00> : vector<64x128xf32>
    %36 = tpu.matmul %33, %35, %cst_31 {dimension_numbers = #tpu.dot_dimension_numbers<[1], [0], [0], [1], [0, 0, 1, 1], [], []>} : vector<64x128xf32>, vector<128x128xf32>, vector<64x128xf32> -> vector<64x128xf32>
    %c3_32 = arith.constant 3 : index
    %c0_33 = arith.constant 0 : index
    %c0_34 = arith.constant 0 : index
    %37 = vector.load %arg4[%c3_32, %c0_33, %c0_34] : memref<6x1x128xf32, #tpu.memory_space<vmem>>, vector<1x1x128xf32>
    %38 = vector.shape_cast %37 : vector<1x1x128xf32> to vector<1x128xf32>
    %39 = vector.broadcast %38 : vector<1x128xf32> to vector<64x128xf32>
    %40 = arith.addf %36, %39 : vector<64x128xf32>
    %cst_35 = arith.constant 0.000000e+00 : f32
    %41 = vector.broadcast %cst_35 : f32 to vector<64x128xf32>
    %42 = arith.maximumf %40, %41 : vector<64x128xf32>
    %c4 = arith.constant 4 : index
    %c0_36 = arith.constant 0 : index
    %c0_37 = arith.constant 0 : index
    %43 = vector.load %arg3[%c4, %c0_36, %c0_37] : memref<6x128x128xf32, #tpu.memory_space<vmem>>, vector<1x128x128xf32>
    %44 = vector.shape_cast %43 : vector<1x128x128xf32> to vector<128x128xf32>
    %cst_38 = arith.constant dense<0.000000e+00> : vector<64x128xf32>
    %45 = tpu.matmul %42, %44, %cst_38 {dimension_numbers = #tpu.dot_dimension_numbers<[1], [0], [0], [1], [0, 0, 1, 1], [], []>} : vector<64x128xf32>, vector<128x128xf32>, vector<64x128xf32> -> vector<64x128xf32>
    %c4_39 = arith.constant 4 : index
    %c0_40 = arith.constant 0 : index
    %c0_41 = arith.constant 0 : index
    %46 = vector.load %arg4[%c4_39, %c0_40, %c0_41] : memref<6x1x128xf32, #tpu.memory_space<vmem>>, vector<1x1x128xf32>
    %47 = vector.shape_cast %46 : vector<1x1x128xf32> to vector<1x128xf32>
    %48 = vector.broadcast %47 : vector<1x128xf32> to vector<64x128xf32>
    %49 = arith.addf %45, %48 : vector<64x128xf32>
    %cst_42 = arith.constant 0.000000e+00 : f32
    %50 = vector.broadcast %cst_42 : f32 to vector<64x128xf32>
    %51 = arith.maximumf %49, %50 : vector<64x128xf32>
    %c5 = arith.constant 5 : index
    %c0_43 = arith.constant 0 : index
    %c0_44 = arith.constant 0 : index
    %52 = vector.load %arg3[%c5, %c0_43, %c0_44] : memref<6x128x128xf32, #tpu.memory_space<vmem>>, vector<1x128x128xf32>
    %53 = vector.shape_cast %52 : vector<1x128x128xf32> to vector<128x128xf32>
    %cst_45 = arith.constant dense<0.000000e+00> : vector<64x128xf32>
    %54 = tpu.matmul %51, %53, %cst_45 {dimension_numbers = #tpu.dot_dimension_numbers<[1], [0], [0], [1], [0, 0, 1, 1], [], []>} : vector<64x128xf32>, vector<128x128xf32>, vector<64x128xf32> -> vector<64x128xf32>
    %c5_46 = arith.constant 5 : index
    %c0_47 = arith.constant 0 : index
    %c0_48 = arith.constant 0 : index
    %55 = vector.load %arg4[%c5_46, %c0_47, %c0_48] : memref<6x1x128xf32, #tpu.memory_space<vmem>>, vector<1x1x128xf32>
    %56 = vector.shape_cast %55 : vector<1x1x128xf32> to vector<1x128xf32>
    %57 = vector.broadcast %56 : vector<1x128xf32> to vector<64x128xf32>
    %58 = arith.addf %54, %57 : vector<64x128xf32>
    %c0_49 = arith.constant 0 : index
    %c0_50 = arith.constant 0 : index
    %c0_51 = arith.constant 0 : index
    %59 = vector.load %arg5[%c0_49, %c0_50, %c0_51] : memref<1x64x128xf32, #tpu.memory_space<vmem>>, vector<1x64x128xf32>
    %60 = vector.shape_cast %59 : vector<1x64x128xf32> to vector<64x128xf32>
    %61 = vector.shape_cast %58 : vector<64x128xf32> to vector<1x64x128xf32>
    tpu.vector_store %arg5[%c0_49, %c0_50, %c0_51], %61 {strides = array<i32>} : memref<1x64x128xf32, #tpu.memory_space<vmem>>, vector<1x64x128xf32>,
    return
  }
  func.func @transform_0(%arg0: i32) -> (i32, i32, i32) {
    %c0_i32 = arith.constant 0 : i32
    %c0_i32_0 = arith.constant 0 : i32
    %c0_i32_1 = arith.constant 0 : i32
    return %arg0, %c0_i32, %c0_i32_0 : i32, i32, i32
  }
  func.func @transform_1(%arg0: i32) -> (i32, i32, i32) {
    %c0_i32 = arith.constant 0 : i32
    %c0_i32_0 = arith.constant 0 : i32
    %c0_i32_1 = arith.constant 0 : i32
    return %arg0, %c0_i32, %c0_i32_0 : i32, i32, i32
  }
  func.func @transform_2(%arg0: i32) -> (i32, i32, i32) {
    %c0_i32 = arith.constant 0 : i32
    %c0_i32_0 = arith.constant 0 : i32
    %c0_i32_1 = arith.constant 0 : i32
    %c0_i32_2 = arith.constant 0 : i32
    return %c0_i32, %c0_i32_0, %c0_i32_1 : i32, i32, i32
  }
  func.func @transform_3(%arg0: i32) -> (i32, i32, i32) {
    %c0_i32 = arith.constant 0 : i32
    %c0_i32_0 = arith.constant 0 : i32
    %c0_i32_1 = arith.constant 0 : i32
    %c0_i32_2 = arith.constant 0 : i32
    return %c0_i32, %c0_i32_0, %c0_i32_1 : i32, i32, i32
  }
  func.func @transform_4(%arg0: i32) -> (i32, i32, i32) {
    %c0_i32 = arith.constant 0 : i32
    %c0_i32_0 = arith.constant 0 : i32
    %c0_i32_1 = arith.constant 0 : i32
    return %arg0, %c0_i32, %c0_i32_0 : i32, i32, i32
  }
}

</mosaic_0001>

<llo_original>
// kernel: tpu_custom_call.1
$region0: #{tpu_custom_call.1}
  #allocation0 [shape = 'u32[]', space=smem, size = 0x4, offset = 0x4, fixed_abs, tag = 'smem constant byte address 0x4 - core index']
  #allocation1 [shape = 'u32[144,128]{1,0:T(1,128)}', space=vmem, size = 0x12000, scoped, tag = 'internal scratch']
  %s0 = inlined_call_operand.hbm [shape: f32[4,64,64], index: 0, kind: input, shape index: {}]
  %s1 = inlined_call_operand.hbm [shape: f32[4,64,128], index: 1, kind: input, shape index: {}]
  %s2 = inlined_call_operand.hbm [shape: f32[6,128,128], index: 2, kind: input, shape index: {}]
  %s3 = inlined_call_operand.hbm [shape: f32[6,1,128], index: 3, kind: input, shape index: {}]
  %s4 = inlined_call_operand.hbm [shape: f32[4,64,128], index: 4, kind: output, shape index: {}]
  %s5 = sld [smem:[#allocation0]]
  $region65: #{tpu_custom_call.1} parent=0
    _
  %s7 = ssub.s32 1, %s5
  %s8 = scalar_select 0, %s7, %s5
  $region1: #{tpu_custom_call.1} parent=0
    #allocation2 [shape = 'u8[65536]{0}', space=vmem, size = 0x10000, scoped, tag = 'input window, operand 0']
    #allocation3 [shape = 's32[2]{0}', space=sflag, size = 0x8, scoped, tag = 'scoped memory for tpu_custom_call.1']
    #allocation4 [shape = 's32[2]{0}', space=sflag, size = 0x8, scoped, tag = 'scoped memory for tpu_custom_call.1']
    #allocation5 [shape = 'u8[65536]{0}', space=vmem, size = 0x10000, scoped, tag = 'input window, operand 1']
    #allocation6 [shape = 's32[2]{0}', space=sflag, size = 0x8, scoped, tag = 'scoped memory for tpu_custom_call.1']
    #allocation7 [shape = 'u8[393216]{0}', space=vmem, size = 0x60000, scoped, tag = 'input window, operand 2, single buffered']
    #allocation8 [shape = 'u8[3072]{0}', space=vmem, size = 0xc00, scoped, tag = 'input window, operand 3, single buffered']
    #allocation9 [shape = 's32[1]{0}', space=sflag, size = 0x4, scoped, tag = 'scoped memory for tpu_custom_call.1']
    #allocation10 [shape = 'u8[65536]{0}', space=vmem, size = 0x10000, scoped, tag = 'output window, operand 0']
    %9 = vsyncpa [#allocation3], 0
    %s10 = scalar_lea.sflag [#allocation3], 1
    %11 = vsyncpa %s10, 0
    %12 = vsyncpa [#allocation6], 0
    %s13 = scalar_lea.sflag [#allocation6], 1
    %14 = vsyncpa %s13, 0
    %15 = vsyncpa [#allocation9], 0
    %16 = vsyncpa [#allocation4], 0
    %s17 = scalar_lea.sflag [#allocation4], 1
    %18 = vsyncpa %s17, 0
    loop: start=0, step=1, limit=6
    $region2: #{tpu_custom_call.1} parent=1 // loop_pre_header
      _
    $region3: #{tpu_custom_call.1} parent=1 // loop_header
      %s20 = sphi 0, %s24
      %p21 = scmp.ge.s32.totalorder %s20, 6
      %s30 = sphi 0, %s32
      %s33 = sphi 0, %s30
      %s34 = sphi 0, %s33
      %s50 = sphi 0, %s34
      %s56 = sphi 0, %s58
      %s59 = sphi 0, %s56
      %s60 = sphi 0, %s59
      %s76 = sphi 0, %s60
      %s80 = sphi 0, %s80
      %s82 = sphi 0, %s80
      %s83 = sphi 0, %s82
      %s97 = sphi 0, %s83
      %s101 = sphi 0, %s101
      %s103 = sphi 0, %s101
      %s104 = sphi 0, %s103
      %s118 = sphi 0, %s104
      %s124 = sphi 0, %s126
      %s127 = sphi 0, %s124
      %s128 = sphi 0, %s127
      %s144 = sphi 0, %s128
    $region4: #{tpu_custom_call.1} parent=1 // loop_header_branch
      %23 = sbr.rel (%p21) target = $region8
    $region5: #{tpu_custom_call.1} parent=1 // loop_body
      %s25 = ssub.s32 %s20, 1
      %s26 = ssub.s32 %s20, 2
      %s27 = sadd.s32 %s20, 1
      %s28 = ssub.s32 %s20, %s27
      %p29 = scmp.eq.s32.totalorder %s28, 0
      %s31 = sadd.s32 %s30, 1
      %s32 = scalar_select %p29, %s30, %s31
      %p35 = pneg %p29
      %p36 = scmp.eq.s32.totalorder %s20, 3
      %p37 = por %p35, %p36
      %p38 = scmp.ne.s32.totalorder %s30, %s33
      %p39 = scmp.eq.s32.totalorder %s20, 0
      %p40 = por %p38, %p39
      %p41 = scmp.ne.s32.totalorder %s30, %s33
      %p42 = scmp.eq.s32.totalorder %s25, 3
      %p43 = por %p41, %p42
      %p44 = scmp.ne.s32.totalorder %s33, %s34
      %p45 = scmp.eq.s32.totalorder %s25, 0
      %p46 = por %p44, %p45
      %p47 = scmp.ne.s32.totalorder %s33, %s34
      %p48 = scmp.eq.s32.totalorder %s26, 3
      %p49 = por %p47, %p48
      %p51 = scmp.ne.s32.totalorder %s34, %s50
      %p52 = scmp.eq.s32.totalorder %s26, 0
      %p53 = por %p51, %p52
      %s54 = ssub.s32 %s20, %s27
      %p55 = scmp.eq.s32.totalorder %s54, 0
      %s57 = sadd.s32 %s56, 1
      %s58 = scalar_select %p55, %s56, %s57
      %p61 = pneg %p55
      %p62 = scmp.eq.s32.totalorder %s20, 3
      %p63 = por %p61, %p62
      %p64 = scmp.ne.s32.totalorder %s56, %s59
      %p65 = scmp.eq.s32.totalorder %s20, 0
      %p66 = por %p64, %p65
      %p67 = scmp.ne.s32.totalorder %s56, %s59
      %p68 = scmp.eq.s32.totalorder %s25, 3
      %p69 = por %p67, %p68
      %p70 = scmp.ne.s32.totalorder %s59, %s60
      %p71 = scmp.eq.s32.totalorder %s25, 0
      %p72 = por %p70, %p71
      %p73 = scmp.ne.s32.totalorder %s59, %s60
      %p74 = scmp.eq.s32.totalorder %s26, 3
      %p75 = por %p73, %p74
      %p77 = scmp.ne.s32.totalorder %s60, %s76
      %p78 = scmp.eq.s32.totalorder %s26, 0
      %p79 = por %p77, %p78
      %s81 = sadd.s32 %s80, 1
      %p84 = scmp.eq.s32.totalorder %s20, 3
      %p85 = scmp.ne.s32.totalorder %s80, %s82
      %p86 = scmp.eq.s32.totalorder %s20, 0
      %p87 = por %p85, %p86
      %p88 = scmp.ne.s32.totalorder %s80, %s82
      %p89 = scmp.eq.s32.totalorder %s25, 3
      %p90 = por %p88, %p89
      %p91 = scmp.ne.s32.totalorder %s82, %s83
      %p92 = scmp.eq.s32.totalorder %s25, 0
      %p93 = por %p91, %p92
      %p94 = scmp.ne.s32.totalorder %s82, %s83
      %p95 = scmp.eq.s32.totalorder %s26, 3
      %p96 = por %p94, %p95
      %p98 = scmp.ne.s32.totalorder %s83, %s97
      %p99 = scmp.eq.s32.totalorder %s26, 0
      %p100 = por %p98, %p99
      %s102 = sadd.s32 %s101, 1
      %p105 = scmp.eq.s32.totalorder %s20, 3
      %p106 = scmp.ne.s32.totalorder %s101, %s103
      %p107 = scmp.eq.s32.totalorder %s20, 0
      %p108 = por %p106, %p107
      %p109 = scmp.ne.s32.totalorder %s101, %s103
      %p110 = scmp.eq.s32.totalorder %s25, 3
      %p111 = por %p109, %p110
      %p112 = scmp.ne.s32.totalorder %s103, %s104
      %p113 = scmp.eq.s32.totalorder %s25, 0
      %p114 = por %p112, %p113
      %p115 = scmp.ne.s32.totalorder %s103, %s104
      %p116 = scmp.eq.s32.totalorder %s26, 3
      %p117 = por %p115, %p116
      %p119 = scmp.ne.s32.totalorder %s104, %s118
      %p120 = scmp.eq.s32.totalorder %s26, 0
      %p121 = por %p119, %p120
      %s122 = ssub.s32 %s20, %s27
      %p123 = scmp.eq.s32.totalorder %s122, 0
      %s125 = sadd.s32 %s124, 1
      %s126 = scalar_select %p123, %s124, %s125
      %p129 = pneg %p123
      %p130 = scmp.eq.s32.totalorder %s20, 3
      %p131 = por %p129, %p130
      %p132 = scmp.ne.s32.totalorder %s124, %s127
      %p133 = scmp.eq.s32.totalorder %s20, 0
      %p134 = por %p132, %p133
      %p135 = scmp.ne.s32.totalorder %s124, %s127
      %p136 = scmp.eq.s32.totalorder %s25, 3
      %p137 = por %p135, %p136
      %p138 = scmp.ne.s32.totalorder %s127, %s128
      %p139 = scmp.eq.s32.totalorder %s25, 0
      %p140 = por %p138, %p139
      %p141 = scmp.ne.s32.totalorder %s127, %s128
      %p142 = scmp.eq.s32.totalorder %s26, 3
      %p143 = por %p141, %p142
      %p145 = scmp.ne.s32.totalorder %s128, %s144
      %p146 = scmp.eq.s32.totalorder %s26, 0
      %p147 = por %p145, %p146
      %p148 = scmp.le.s32.totalorder 1, %s20
      %p149 = scmp.lt.s32.totalorder %s20, 5
      %p150 = pnand %p148, %p149
      %p151 = pneg %p150
      // Predicated region
      $region9: #{tpu_custom_call.1} parent=5 // pred_check
        _
      $region10: #{tpu_custom_call.1} parent=5 // pred_check_branch
        %153 = sbr.rel (%p150) target = $region12
      $region11: #{tpu_custom_call.1} parent=5 // pred_region
        %s154 = ssub.s32 %s20, 1
        // Predicated region
        $region13: #{tpu_custom_call.1} parent=11 // pred_check
          %p155 = pneg %p93
        $region14: #{tpu_custom_call.1} parent=11 // pred_check_branch
          %157 = sbr.rel (%p155) target = $region16
        $region15: #{tpu_custom_call.1} parent=11 // pred_region
          %s159 = ssub.s32 12288, 12288
          %160 = vsyncadd [#allocation6], %s159
          %s161 = sshll.u32 [#allocation7], 4
          %s162 = int_to_ptr.vmem [resolvable:$true] %s161
          %167 = dma.hbm_to_vmem [thread:$0]  %s2, 12288, %s162, [#allocation6], 128, 128, 8
        $region16: #{tpu_custom_call.1} parent=11 // pred_fallthru
          _
        // Predicated region
        $region17: #{tpu_custom_call.1} parent=11 // pred_check
          %p168 = pneg %p114
        $region18: #{tpu_custom_call.1} parent=11 // pred_check_branch
          %170 = sbr.rel (%p168) target = $region20
        $region19: #{tpu_custom_call.1} parent=11 // pred_region
          %s172 = ssub.s32 96, 96
          %173 = vsyncadd [#allocation9], %s172
          %s174 = sshll.u32 [#allocation8], 4
          %s175 = int_to_ptr.vmem [resolvable:$true] %s174
          %180 = dma.hbm_to_vmem [thread:$0]  %s3, 96, %s175, [#allocation9], 16, 16, 1
        $region20: #{tpu_custom_call.1} parent=11 // pred_fallthru
          _
      $region12: #{tpu_custom_call.1} parent=5 // pred_fallthru
        _
      %p181 = scmp.lt.s32.totalorder %s20, 4
      // Predicated region
      $region21: #{tpu_custom_call.1} parent=5 // pred_check
        %p182 = pneg %p181
      $region22: #{tpu_custom_call.1} parent=5 // pred_check_branch
        %184 = sbr.rel (%p182) target = $region24
      $region23: #{tpu_custom_call.1} parent=5 // pred_region
        // Predicated region
        $region25: #{tpu_custom_call.1} parent=23 // pred_check
          %p185 = pneg %p40
        $region26: #{tpu_custom_call.1} parent=23 // pred_check_branch
          %187 = sbr.rel (%p185) target = $region28
        $region27: #{tpu_custom_call.1} parent=23 // pred_region
          %s188 = sand.u32 %s30, 1
          %s189 = scalar_lea.sflag [#allocation3], %s188
          %s190 = sand.u32 %s30, 1
          %s191 = smul.addr %s190, 64
          %s192 = scalar_lea.vmem [#allocation2], %s191
          %s194 = ssub.s32 1024, 1024
          %195 = vsyncadd %s189, %s194
          %s196 = smul.addr %s20, 8
          %s197 = smul.addr %s196, 128
          %s198 = scalar_lea.hbm %s0, %s197
          %s199 = sshll.u32 %s192, 4
          %s200 = int_to_ptr.vmem [resolvable:$true] %s199
          %205 = dma.hbm_to_vmem [thread:$0]  %s198, 1024, %s200, %s189, 128, 128, 8
        $region28: #{tpu_custom_call.1} parent=23 // pred_fallthru
          _
        // Predicated region
        $region29: #{tpu_custom_call.1} parent=23 // pred_check
          %p206 = pneg %p66
        $region30: #{tpu_custom_call.1} parent=23 // pred_check_branch
          %208 = sbr.rel (%p206) target = $region32
        $region31: #{tpu_custom_call.1} parent=23 // pred_region
          %s209 = sand.u32 %s20, 1
          %s210 = scalar_lea.sflag [#allocation6], %s209
          %s211 = sand.u32 %s56, 1
          %s212 = smul.addr %s211, 64
          %s213 = scalar_lea.vmem [#allocation5], %s212
          %s215 = ssub.s32 1024, 1024
          %216 = vsyncadd %s210, %s215
          %s217 = smul.addr %s20, 8
          %s218 = smul.addr %s217, 128
          %s219 = scalar_lea.hbm %s1, %s218
          %s220 = sshll.u32 %s213, 4
          %s221 = int_to_ptr.vmem [resolvable:$true] %s220
          %226 = dma.hbm_to_vmem [thread:$0]  %s219, 1024, %s221, %s210, 128, 128, 8
        $region32: #{tpu_custom_call.1} parent=23 // pred_fallthru
          _
      $region24: #{tpu_custom_call.1} parent=5 // pred_fallthru
        _
      %p227 = scmp.le.s32.totalorder 1, %s20
      %p228 = scmp.lt.s32.totalorder %s20, 5
      %p229 = pnand %p227, %p228
      %p230 = pneg %p229
      // Predicated region
      $region33: #{tpu_custom_call.1} parent=5 // pred_check
        _
      $region34: #{tpu_custom_call.1} parent=5 // pred_check_branch
        %232 = sbr.rel (%p229) target = $region36
      $region35: #{tpu_custom_call.1} parent=5 // pred_region
        %s233 = ssub.s32 %s20, 1
        %s234 = sand.u32 %s33, 1
        %s235 = scalar_lea.sflag [#allocation3], %s234
        %s236 = sand.u32 %s33, 1
        %s237 = smul.addr %s236, 64
        %s238 = scalar_lea.vmem [#allocation2], %s237
        // Predicated region
        $region37: #{tpu_custom_call.1} parent=35 // pred_check
          %p239 = pneg %p46
        $region38: #{tpu_custom_call.1} parent=35 // pred_check_branch
          %241 = sbr.rel (%p239) target = $region40
        $region39: #{tpu_custom_call.1} parent=35 // pred_region
          %242 = dma.done %s235, 1024
        $region40: #{tpu_custom_call.1} parent=35 // pred_fallthru
          _
        %s243 = sand.u32 %s25, 1
        %s244 = scalar_lea.sflag [#allocation6], %s243
        %s245 = sand.u32 %s59, 1
        %s246 = smul.addr %s245, 64
        %s247 = scalar_lea.vmem [#allocation5], %s246
        // Predicated region
        $region41: #{tpu_custom_call.1} parent=35 // pred_check
          %p248 = pneg %p72
        $region42: #{tpu_custom_call.1} parent=35 // pred_check_branch
          %250 = sbr.rel (%p248) target = $region44
        $region43: #{tpu_custom_call.1} parent=35 // pred_region
          %251 = dma.done %s244, 1024
        $region44: #{tpu_custom_call.1} parent=35 // pred_fallthru
          _
        // Predicated region
        $region45: #{tpu_custom_call.1} parent=35 // pred_check
          %p252 = pneg %p93
        $region46: #{tpu_custom_call.1} parent=35 // pred_check_branch
          %254 = sbr.rel (%p252) target = $region48
        $region47: #{tpu_custom_call.1} parent=35 // pred_region
          %255 = dma.done [#allocation6], 12288
        $region48: #{tpu_custom_call.1} parent=35 // pred_fallthru
          _
        // Predicated region
        $region49: #{tpu_custom_call.1} parent=35 // pred_check
          %p256 = pneg %p114
        $region50: #{tpu_custom_call.1} parent=35 // pred_check_branch
          %258 = sbr.rel (%p256) target = $region52
        $region51: #{tpu_custom_call.1} parent=35 // pred_region
          %259 = dma.done [#allocation9], 96
        $region52: #{tpu_custom_call.1} parent=35 // pred_fallthru
          _
        %s260 = sand.u32 %s33, 1
        %s261 = scalar_lea.sflag [#allocation3], %s260
        %s262 = sand.u32 %s33, 1
        %s263 = smul.addr %s262, 64
        %s264 = scalar_lea.vmem [#allocation2], %s263
        %p265 = pneg %p46
        %p266 = pneg %p43
        %s267 = sand.u32 %s25, 1
        %s268 = scalar_lea.sflag [#allocation6], %s267
        %s269 = sand.u32 %s59, 1
        %s270 = smul.addr %s269, 64
        %s271 = scalar_lea.vmem [#allocation5], %s270
        %p272 = pneg %p72
        %p273 = pneg %p69
        %p274 = pneg %p93
        %p275 = pneg %p90
        %p276 = pneg %p114
        %p277 = pneg %p111
        %p278 = pneg %p140
        %p279 = pneg %p137
        %s280 = sand.u32 %s127, 1
        %s281 = scalar_lea.sflag [#allocation4], %s280
        %s282 = sand.u32 %s127, 1
        %s283 = smul.addr %s282, 64
        %s284 = scalar_lea.vmem [#allocation10], %s283
        %v285 = vld [vmem:[%s238] sm:$0xff]
        %v286 = vld [vmem:[%s238 + $0x8] sm:$0xff]
        %v287 = vld [vmem:[%s238 + $0x10] sm:$0xff]
        %v288 = vld [vmem:[%s238 + $0x18] sm:$0xff]
        %v289 = vld [vmem:[%s238 + $0x20] sm:$0xff]
        %v290 = vld [vmem:[%s238 + $0x28] sm:$0xff]
        %v291 = vld [vmem:[%s238 + $0x30] sm:$0xff]
        %v292 = vld [vmem:[%s238 + $0x38] sm:$0xff]
        %v293 = vld [vmem:[%s247] sm:$0xff]
        %v294 = vld [vmem:[%s247 + $0x8] sm:$0xff]
        %v295 = vld [vmem:[%s247 + $0x10] sm:$0xff]
        %v296 = vld [vmem:[%s247 + $0x18] sm:$0xff]
        %v297 = vld [vmem:[%s247 + $0x20] sm:$0xff]
        %v298 = vld [vmem:[%s247 + $0x28] sm:$0xff]
        %v299 = vld [vmem:[%s247 + $0x30] sm:$0xff]
        %v300 = vld [vmem:[%s247 + $0x38] sm:$0xff]
        %v301 = vld [vmem:[#allocation7] sm:$0xff]
        %v302 = vld [vmem:[#allocation7 + $0x8] sm:$0xff]
        %v303 = vld [vmem:[#allocation7 + $0x10] sm:$0xff]
        %v304 = vld [vmem:[#allocation7 + $0x18] sm:$0xff]
        %v305 = vld [vmem:[#allocation7 + $0x20] sm:$0xff]
        %v306 = vld [vmem:[#allocation7 + $0x28] sm:$0xff]
        %v307 = vld [vmem:[#allocation7 + $0x30] sm:$0xff]
        %v308 = vld [vmem:[#allocation7 + $0x38] sm:$0xff]
        %v309 = vld [vmem:[#allocation7 + $0x40] sm:$0xff]
        %v310 = vld [vmem:[#allocation7 + $0x48] sm:$0xff]
        %v311 = vld [vmem:[#allocation7 + $0x50] sm:$0xff]
        %v312 = vld [vmem:[#allocation7 + $0x58] sm:$0xff]
        %v313 = vld [vmem:[#allocation7 + $0x60] sm:$0xff]
        %v314 = vld [vmem:[#allocation7 + $0x68] sm:$0xff]
        %v315 = vld [vmem:[#allocation7 + $0x70] sm:$0xff]
        %v316 = vld [vmem:[#allocation7 + $0x78] sm:$0xff]
        %317 = vmatprep.subr.mxu0 0.0
        %318 = vmatpush1.msra.mxu0 %v316
        %319 = vmatprep.subr.mxu0 0.0
        %320 = vmatpush1.msra.mxu0 %v315
        %321 = vmatprep.subr.mxu0 0.0
        %322 = vmatpush1.msra.mxu0 %v314
        %323 = vmatprep.subr.mxu0 0.0
        %324 = vmatpush1.msra.mxu0 %v313
        %325 = vmatprep.subr.mxu0 0.0
        %326 = vmatpush1.msra.mxu0 %v312
        %327 = vmatprep.subr.mxu0 0.0
        %328 = vmatpush1.msra.mxu0 %v311
        %329 = vmatprep.subr.mxu0 0.0
        %330 = vmatpush1.msra.mxu0 %v310
        %331 = vmatprep.subr.mxu0 0.0
        %332 = vmatpush1.msra.mxu0 %v309
        %333 = vmatprep.subr.mxu0 0.0
        %334 = vmatpush1.msra.mxu0 %v308
        %335 = vmatprep.subr.mxu0 0.0
        %336 = vmatpush1.msra.mxu0 %v307
        %337 = vmatprep.subr.mxu0 0.0
        %338 = vmatpush1.msra.mxu0 %v306
        %339 = vmatprep.subr.mxu0 0.0
        %340 = vmatpush1.msra.mxu0 %v305
        %341 = vmatprep.subr.mxu0 0.0
        %342 = vmatpush1.msra.mxu0 %v304
        %343 = vmatprep.subr.mxu0 0.0
        %344 = vmatpush1.msra.mxu0 %v303
        %345 = vmatprep.subr.mxu0 0.0
        %346 = vmatpush1.msra.mxu0 %v302
        %347 = vmatprep.subr.mxu0 0.0
        %348 = vmatpush1.msra.mxu0 %v301
        %349 = vmatprep.subr.mxu0 0.0
        %350 = vmatpush2.msra.mxu0 0.0
        %351 = vmatprep.subr.mxu0 0.0
        %352 = vmatpush2.msra.mxu0 0.0
        %353 = vmatprep.subr.mxu0 0.0
        %354 = vmatpush2.msra.mxu0 0.0
        %355 = vmatprep.subr.mxu0 0.0
        %356 = vmatpush2.msra.mxu0 0.0
        %357 = vmatprep.subr.mxu0 0.0
        %358 = vmatpush2.msra.mxu0 0.0
        %359 = vmatprep.subr.mxu0 0.0
        %360 = vmatpush2.msra.mxu0 0.0
        %361 = vmatprep.subr.mxu0 0.0
        %362 = vmatpush2.msra.mxu0 0.0
        %363 = vmatprep.subr.mxu0 0.0
        %364 = vmatpush2.msra.mxu0 0.0
        %365 = vmatprep.subr.mxu0 0.0
        %366 = vmatpush2.msra.mxu0 0.0
        %367 = vmatprep.subr.mxu0 0.0
        %368 = vmatpush2.msra.mxu0 0.0
        %369 = vmatprep.subr.mxu0 0.0
        %370 = vmatpush2.msra.mxu0 0.0
        %371 = vmatprep.subr.mxu0 0.0
        %372 = vmatpush2.msra.mxu0 0.0
        %373 = vmatprep.subr.mxu0 0.0
        %374 = vmatpush2.msra.mxu0 0.0
        %375 = vmatprep.subr.mxu0 0.0
        %376 = vmatpush2.msra.mxu0 0.0
        %377 = vmatprep.subr.mxu0 0.0
        %378 = vmatpush2.msra.mxu0 0.0
        %379 = vmatprep.subr.mxu0 0.0
        %380 = vmatpush2.msra.mxu0 0.0
        %381 = vmatprep.mubr.f32.mxu0 0.0
        %382 = vmatmul.mubr.f32.gmra.mxu0 %v293
        %v383 = vpop.f32.mrf.mxu0
        %v384 = vadd.f32 0.0, %v383
        %v385 = vpop.f32.mrf.mxu0
        %386 = vmatprep.mubr.f32.mxu0 0.0
        %387 = vmatmul.mubr.f32.gmra.mxu0 %v294
        %v388 = vpop.f32.mrf.mxu0
        %v389 = vadd.f32 0.0, %v388
        %v390 = vpop.f32.mrf.mxu0
        %391 = vmatprep.mubr.f32.mxu0 0.0
        %392 = vmatmul.mubr.f32.gmra.mxu0 %v295
        %v393 = vpop.f32.mrf.mxu0
        %v394 = vadd.f32 0.0, %v393
        %v395 = vpop.f32.mrf.mxu0
        %396 = vmatprep.mubr.f32.mxu0 0.0
        %397 = vmatmul.mubr.f32.gmra.mxu0 %v296
        %v398 = vpop.f32.mrf.mxu0
        %v399 = vadd.f32 0.0, %v398
        %v400 = vpop.f32.mrf.mxu0
        %401 = vmatprep.mubr.f32.mxu0 0.0
        %402 = vmatmul.mubr.f32.gmra.mxu0 %v297
        %v403 = vpop.f32.mrf.mxu0
        %v404 = vadd.f32 0.0, %v403
        %v405 = vpop.f32.mrf.mxu0
        %406 = vmatprep.mubr.f32.mxu0 0.0
        %407 = vmatmul.mubr.f32.gmra.mxu0 %v298
        %v408 = vpop.f32.mrf.mxu0
        %v409 = vadd.f32 0.0, %v408
        %v410 = vpop.f32.mrf.mxu0
        %411 = vmatprep.mubr.f32.mxu0 0.0
        %412 = vmatmul.mubr.f32.gmra.mxu0 %v299
        %v413 = vpop.f32.mrf.mxu0
        %v414 = vadd.f32 0.0, %v413
        %v415 = vpop.f32.mrf.mxu0
        %416 = vmatprep.mubr.f32.mxu0 0.0
        %417 = vmatmul.mubr.f32.gmra.mxu0 %v300
        %v418 = vpop.f32.mrf.mxu0
        %v419 = vadd.f32 0.0, %v418
        %v420 = vpop.f32.mrf.mxu0
        %421 = vdwg.mxu0
        %v422 = vld [vmem:[#allocation8] sm:$0x1]
        %v424 = vlaneseq
        %v425 = vshrl.u32 %v424, 7
        %v426 = vsub.s32 0, %v425
        %v427 = vrot.slane %v422, %v426
        %vm429 = vcmask 523264
        %v431 = vsel %vm429, %v285, 0
        %v434 = vsel %vm429, %v286, 0
        %v437 = vsel %vm429, %v287, 0
        %v440 = vsel %vm429, %v288, 0
        %v443 = vsel %vm429, %v289, 0
        %v446 = vsel %vm429, %v290, 0
        %v449 = vsel %vm429, %v291, 0
        %v452 = vsel %vm429, %v292, 0
        %454 = vmatprep.subr.mxu0 0.0
        %455 = vmatpush1.msra.mxu0 0.0
        %456 = vmatprep.subr.mxu0 0.0
        %457 = vmatpush1.msra.mxu0 0.0
        %458 = vmatprep.subr.mxu0 0.0
        %459 = vmatpush1.msra.mxu0 0.0
        %460 = vmatprep.subr.mxu0 0.0
        %461 = vmatpush1.msra.mxu0 0.0
        %462 = vmatprep.subr.mxu0 0.0
        %463 = vmatpush1.msra.mxu0 0.0
        %464 = vmatprep.subr.mxu0 0.0
        %465 = vmatpush1.msra.mxu0 0.0
        %466 = vmatprep.subr.mxu0 0.0
        %467 = vmatpush1.msra.mxu0 0.0
        %468 = vmatprep.subr.mxu0 0.0
        %469 = vmatpush1.msra.mxu0 0.0
        %470 = vmatprep.subr.mxu0 0.0
        %471 = vmatpush1.msra.mxu0 %v419
        %472 = vmatprep.subr.mxu0 0.0
        %473 = vmatpush1.msra.mxu0 %v414
        %474 = vmatprep.subr.mxu0 0.0
        %475 = vmatpush1.msra.mxu0 %v409
        %476 = vmatprep.subr.mxu0 0.0
        %477 = vmatpush1.msra.mxu0 %v404
        %478 = vmatprep.subr.mxu0 0.0
        %479 = vmatpush1.msra.mxu0 %v399
        %480 = vmatprep.subr.mxu0 0.0
        %481 = vmatpush1.msra.mxu0 %v394
        %482 = vmatprep.subr.mxu0 0.0
        %483 = vmatpush1.msra.mxu0 %v389
        %484 = vmatprep.subr.mxu0 0.0
        %485 = vmatpush1.msra.mxu0 %v384
        %486 = vmatprep.subr.mxu0 0.0
        %487 = vmatpush2.msra.mxu0 0.0
        %488 = vmatprep.subr.mxu0 0.0
        %489 = vmatpush2.msra.mxu0 0.0
        %490 = vmatprep.subr.mxu0 0.0
        %491 = vmatpush2.msra.mxu0 0.0
        %492 = vmatprep.subr.mxu0 0.0
        %493 = vmatpush2.msra.mxu0 0.0
        %494 = vmatprep.subr.mxu0 0.0
        %495 = vmatpush2.msra.mxu0 0.0
        %496 = vmatprep.subr.mxu0 0.0
        %497 = vmatpush2.msra.mxu0 0.0
        %498 = vmatprep.subr.mxu0 0.0
        %499 = vmatpush2.msra.mxu0 0.0
        %500 = vmatprep.subr.mxu0 0.0
        %501 = vmatpush2.msra.mxu0 0.0
        %502 = vmatprep.subr.mxu0 0.0
        %503 = vmatpush2.msra.mxu0 0.0
        %504 = vmatprep.subr.mxu0 0.0
        %505 = vmatpush2.msra.mxu0 0.0
        %506 = vmatprep.subr.mxu0 0.0
        %507 = vmatpush2.msra.mxu0 0.0
        %508 = vmatprep.subr.mxu0 0.0
        %509 = vmatpush2.msra.mxu0 0.0
        %510 = vmatprep.subr.mxu0 0.0
        %511 = vmatpush2.msra.mxu0 0.0
        %512 = vmatprep.subr.mxu0 0.0
        %513 = vmatpush2.msra.mxu0 0.0
        %514 = vmatprep.subr.mxu0 0.0
        %515 = vmatpush2.msra.mxu0 0.0
        %516 = vmatprep.subr.mxu0 0.0
        %517 = vmatpush2.msra.mxu0 0.0
        %518 = vmatprep.mubr.f32.mxu0 0.0
        %519 = vmatmul.mubr.f32.gmra.mxu0 %v431
        %v520 = vpop.f32.mrf.mxu0
        %v521 = vadd.f32 %v427, %v520
        %v522 = vpop.f32.mrf.mxu0
        %523 = vmatprep.mubr.f32.mxu0 0.0
        %524 = vmatmul.mubr.f32.gmra.mxu0 %v434
        %v525 = vpop.f32.mrf.mxu0
        %v526 = vadd.f32 %v427, %v525
        %v527 = vpop.f32.mrf.mxu0
        %528 = vmatprep.mubr.f32.mxu0 0.0
        %529 = vmatmul.mubr.f32.gmra.mxu0 %v437
        %v530 = vpop.f32.mrf.mxu0
        %v531 = vadd.f32 %v427, %v530
        %v532 = vpop.f32.mrf.mxu0
        %533 = vmatprep.mubr.f32.mxu0 0.0
        %534 = vmatmul.mubr.f32.gmra.mxu0 %v440
        %v535 = vpop.f32.mrf.mxu0
        %v536 = vadd.f32 %v427, %v535
        %v537 = vpop.f32.mrf.mxu0
        %538 = vmatprep.mubr.f32.mxu0 0.0
        %539 = vmatmul.mubr.f32.gmra.mxu0 %v443
        %v540 = vpop.f32.mrf.mxu0
        %v541 = vadd.f32 %v427, %v540
        %v542 = vpop.f32.mrf.mxu0
        %543 = vmatprep.mubr.f32.mxu0 0.0
        %544 = vmatmul.mubr.f32.gmra.mxu0 %v446
        %v545 = vpop.f32.mrf.mxu0
        %v546 = vadd.f32 %v427, %v545
        %v547 = vpop.f32.mrf.mxu0
        %548 = vmatprep.mubr.f32.mxu0 0.0
        %549 = vmatmul.mubr.f32.gmra.mxu0 %v449
        %v550 = vpop.f32.mrf.mxu0
        %v551 = vadd.f32 %v427, %v550
        %v552 = vpop.f32.mrf.mxu0
        %553 = vmatprep.mubr.f32.mxu0 0.0
        %554 = vmatmul.mubr.f32.gmra.mxu0 %v452
        %v555 = vpop.f32.mrf.mxu0
        %v556 = vadd.f32 %v427, %v555
        %v557 = vpop.f32.mrf.mxu0
        %558 = vdwg.mxu0
        %v559 = vmax.f32 %v521, 0.0
        %v560 = vmax.f32 %v526, 0.0
        %v561 = vmax.f32 %v531, 0.0
        %v562 = vmax.f32 %v536, 0.0
        %v563 = vmax.f32 %v541, 0.0
        %v564 = vmax.f32 %v546, 0.0
        %v565 = vmax.f32 %v551, 0.0
        %v566 = vmax.f32 %v556, 0.0
        %s567 = scalar_lea.vmem [#allocation7], 128
        %v568 = vld [vmem:[%s567] sm:$0xff]
        %v569 = vld [vmem:[%s567 + $0x8] sm:$0xff]
        %v570 = vld [vmem:[%s567 + $0x10] sm:$0xff]
        %v571 = vld [vmem:[%s567 + $0x18] sm:$0xff]
        %v572 = vld [vmem:[%s567 + $0x20] sm:$0xff]
        %v573 = vld [vmem:[%s567 + $0x28] sm:$0xff]
        %v574 = vld [vmem:[%s567 + $0x30] sm:$0xff]
        %v575 = vld [vmem:[%s567 + $0x38] sm:$0xff]
        %v576 = vld [vmem:[%s567 + $0x40] sm:$0xff]
        %v577 = vld [vmem:[%s567 + $0x48] sm:$0xff]
        %v578 = vld [vmem:[%s567 + $0x50] sm:$0xff]
        %v579 = vld [vmem:[%s567 + $0x58] sm:$0xff]
        %v580 = vld [vmem:[%s567 + $0x60] sm:$0xff]
        %v581 = vld [vmem:[%s567 + $0x68] sm:$0xff]
        %v582 = vld [vmem:[%s567 + $0x70] sm:$0xff]
        %v583 = vld [vmem:[%s567 + $0x78] sm:$0xff]
        %584 = vmatprep.subr.mxu0 0.0
        %585 = vmatpush1.msra.mxu0 %v583
        %586 = vmatprep.subr.mxu0 0.0
        %587 = vmatpush1.msra.mxu0 %v582
        %588 = vmatprep.subr.mxu0 0.0
        %589 = vmatpush1.msra.mxu0 %v581
        %590 = vmatprep.subr.mxu0 0.0
        %591 = vmatpush1.msra.mxu0 %v580
        %592 = vmatprep.subr.mxu0 0.0
        %593 = vmatpush1.msra.mxu0 %v579
        %594 = vmatprep.subr.mxu0 0.0
        %595 = vmatpush1.msra.mxu0 %v578
        %596 = vmatprep.subr.mxu0 0.0
        %597 = vmatpush1.msra.mxu0 %v577
        %598 = vmatprep.subr.mxu0 0.0
        %599 = vmatpush1.msra.mxu0 %v576
        %600 = vmatprep.subr.mxu0 0.0
        %601 = vmatpush1.msra.mxu0 %v575
        %602 = vmatprep.subr.mxu0 0.0
        %603 = vmatpush1.msra.mxu0 %v574
        %604 = vmatprep.subr.mxu0 0.0
        %605 = vmatpush1.msra.mxu0 %v573
        %606 = vmatprep.subr.mxu0 0.0
        %607 = vmatpush1.msra.mxu0 %v572
        %608 = vmatprep.subr.mxu0 0.0
        %609 = vmatpush1.msra.mxu0 %v571
        %610 = vmatprep.subr.mxu0 0.0
        %611 = vmatpush1.msra.mxu0 %v570
        %612 = vmatprep.subr.mxu0 0.0
        %613 = vmatpush1.msra.mxu0 %v569
        %614 = vmatprep.subr.mxu0 0.0
        %615 = vmatpush1.msra.mxu0 %v568
        %616 = vmatprep.subr.mxu0 0.0
        %617 = vmatpush2.msra.mxu0 0.0
        %618 = vmatprep.subr.mxu0 0.0
        %619 = vmatpush2.msra.mxu0 0.0
        %620 = vmatprep.subr.mxu0 0.0
        %621 = vmatpush2.msra.mxu0 0.0
        %622 = vmatprep.subr.mxu0 0.0
        %623 = vmatpush2.msra.mxu0 0.0
        %624 = vmatprep.subr.mxu0 0.0
        %625 = vmatpush2.msra.mxu0 0.0
        %626 = vmatprep.subr.mxu0 0.0
        %627 = vmatpush2.msra.mxu0 0.0
        %628 = vmatprep.subr.mxu0 0.0
        %629 = vmatpush2.msra.mxu0 0.0
        %630 = vmatprep.subr.mxu0 0.0
        %631 = vmatpush2.msra.mxu0 0.0
        %632 = vmatprep.subr.mxu0 0.0
        %633 = vmatpush2.msra.mxu0 0.0
        %634 = vmatprep.subr.mxu0 0.0
        %635 = vmatpush2.msra.mxu0 0.0
        %636 = vmatprep.subr.mxu0 0.0
        %637 = vmatpush2.msra.mxu0 0.0
        %638 = vmatprep.subr.mxu0 0.0
        %639 = vmatpush2.msra.mxu0 0.0
        %640 = vmatprep.subr.mxu0 0.0
        %641 = vmatpush2.msra.mxu0 0.0
        %642 = vmatprep.subr.mxu0 0.0
        %643 = vmatpush2.msra.mxu0 0.0
        %644 = vmatprep.subr.mxu0 0.0
        %645 = vmatpush2.msra.mxu0 0.0
        %646 = vmatprep.subr.mxu0 0.0
        %647 = vmatpush2.msra.mxu0 0.0
        %648 = vmatprep.mubr.f32.mxu0 0.0
        %649 = vmatmul.mubr.f32.gmra.mxu0 %v559
        %v650 = vpop.f32.mrf.mxu0
        %v651 = vadd.f32 0.0, %v650
        %v652 = vpop.f32.mrf.mxu0
        %653 = vmatprep.mubr.f32.mxu0 0.0
        %654 = vmatmul.mubr.f32.gmra.mxu0 %v560
        %v655 = vpop.f32.mrf.mxu0
        %v656 = vadd.f32 0.0, %v655
        %v657 = vpop.f32.mrf.mxu0
        %658 = vmatprep.mubr.f32.mxu0 0.0
        %659 = vmatmul.mubr.f32.gmra.mxu0 %v561
        %v660 = vpop.f32.mrf.mxu0
        %v661 = vadd.f32 0.0, %v660
        %v662 = vpop.f32.mrf.mxu0
        %663 = vmatprep.mubr.f32.mxu0 0.0
        %664 = vmatmul.mubr.f32.gmra.mxu0 %v562
        %v665 = vpop.f32.mrf.mxu0
        %v666 = vadd.f32 0.0, %v665
        %v667 = vpop.f32.mrf.mxu0
        %668 = vmatprep.mubr.f32.mxu0 0.0
        %669 = vmatmul.mubr.f32.gmra.mxu0 %v563
        %v670 = vpop.f32.mrf.mxu0
        %v671 = vadd.f32 0.0, %v670
        %v672 = vpop.f32.mrf.mxu0
        %673 = vmatprep.mubr.f32.mxu0 0.0
        %674 = vmatmul.mubr.f32.gmra.mxu0 %v564
        %v675 = vpop.f32.mrf.mxu0
        %v676 = vadd.f32 0.0, %v675
        %v677 = vpop.f32.mrf.mxu0
        %678 = vmatprep.mubr.f32.mxu0 0.0
        %679 = vmatmul.mubr.f32.gmra.mxu0 %v565
        %v680 = vpop.f32.mrf.mxu0
        %v681 = vadd.f32 0.0, %v680
        %v682 = vpop.f32.mrf.mxu0
        %683 = vmatprep.mubr.f32.mxu0 0.0
        %684 = vmatmul.mubr.f32.gmra.mxu0 %v566
        %v685 = vpop.f32.mrf.mxu0
        %v686 = vadd.f32 0.0, %v685
        %v687 = vpop.f32.mrf.mxu0
        %688 = vdwg.mxu0
        %s689 = scalar_lea.vmem [#allocation8], 1
        %v690 = vld [vmem:[%s689] sm:$0x1]
        %v692 = vlaneseq
        %v693 = vshrl.u32 %v692, 7
        %v694 = vsub.s32 0, %v693
        %v695 = vrot.slane %v690, %v694
        %697 = vmatprep.subr.mxu0 0.0
        %698 = vmatpush1.msra.mxu0 0.0
        %699 = vmatprep.subr.mxu0 0.0
        %700 = vmatpush1.msra.mxu0 0.0
        %701 = vmatprep.subr.mxu0 0.0
        %702 = vmatpush1.msra.mxu0 0.0
        %703 = vmatprep.subr.mxu0 0.0
        %704 = vmatpush1.msra.mxu0 0.0
        %705 = vmatprep.subr.mxu0 0.0
        %706 = vmatpush1.msra.mxu0 0.0
        %707 = vmatprep.subr.mxu0 0.0
        %708 = vmatpush1.msra.mxu0 0.0
        %709 = vmatprep.subr.mxu0 0.0
        %710 = vmatpush1.msra.mxu0 0.0
        %711 = vmatprep.subr.mxu0 0.0
        %712 = vmatpush1.msra.mxu0 0.0
        %713 = vmatprep.subr.mxu0 0.0
        %714 = vmatpush1.msra.mxu0 %v686
        %715 = vmatprep.subr.mxu0 0.0
        %716 = vmatpush1.msra.mxu0 %v681
        %717 = vmatprep.subr.mxu0 0.0
        %718 = vmatpush1.msra.mxu0 %v676
        %719 = vmatprep.subr.mxu0 0.0
        %720 = vmatpush1.msra.mxu0 %v671
        %721 = vmatprep.subr.mxu0 0.0
        %722 = vmatpush1.msra.mxu0 %v666
        %723 = vmatprep.subr.mxu0 0.0
        %724 = vmatpush1.msra.mxu0 %v661
        %725 = vmatprep.subr.mxu0 0.0
        %726 = vmatpush1.msra.mxu0 %v656
        %727 = vmatprep.subr.mxu0 0.0
        %728 = vmatpush1.msra.mxu0 %v651
        %729 = vmatprep.subr.mxu0 0.0
        %730 = vmatpush2.msra.mxu0 0.0
        %731 = vmatprep.subr.mxu0 0.0
        %732 = vmatpush2.msra.mxu0 0.0
        %733 = vmatprep.subr.mxu0 0.0
        %734 = vmatpush2.msra.mxu0 0.0
        %735 = vmatprep.subr.mxu0 0.0
        %736 = vmatpush2.msra.mxu0 0.0
        %737 = vmatprep.subr.mxu0 0.0
        %738 = vmatpush2.msra.mxu0 0.0
        %739 = vmatprep.subr.mxu0 0.0
        %740 = vmatpush2.msra.mxu0 0.0
        %741 = vmatprep.subr.mxu0 0.0
        %742 = vmatpush2.msra.mxu0 0.0
        %743 = vmatprep.subr.mxu0 0.0
        %744 = vmatpush2.msra.mxu0 0.0
        %745 = vmatprep.subr.mxu0 0.0
        %746 = vmatpush2.msra.mxu0 0.0
        %747 = vmatprep.subr.mxu0 0.0
        %748 = vmatpush2.msra.mxu0 0.0
        %749 = vmatprep.subr.mxu0 0.0
        %750 = vmatpush2.msra.mxu0 0.0
        %751 = vmatprep.subr.mxu0 0.0
        %752 = vmatpush2.msra.mxu0 0.0
        %753 = vmatprep.subr.mxu0 0.0
        %754 = vmatpush2.msra.mxu0 0.0
        %755 = vmatprep.subr.mxu0 0.0
        %756 = vmatpush2.msra.mxu0 0.0
        %757 = vmatprep.subr.mxu0 0.0
        %758 = vmatpush2.msra.mxu0 0.0
        %759 = vmatprep.subr.mxu0 0.0
        %760 = vmatpush2.msra.mxu0 0.0
        %761 = vmatprep.mubr.f32.mxu0 0.0
        %762 = vmatmul.mubr.f32.gmra.mxu0 %v431
        %v763 = vpop.f32.mrf.mxu0
        %v764 = vadd.f32 %v695, %v763
        %v765 = vpop.f32.mrf.mxu0
        %766 = vmatprep.mubr.f32.mxu0 0.0
        %767 = vmatmul.mubr.f32.gmra.mxu0 %v434
        %v768 = vpop.f32.mrf.mxu0
        %v769 = vadd.f32 %v695, %v768
        %v770 = vpop.f32.mrf.mxu0
        %771 = vmatprep.mubr.f32.mxu0 0.0
        %772 = vmatmul.mubr.f32.gmra.mxu0 %v437
        %v773 = vpop.f32.mrf.mxu0
        %v774 = vadd.f32 %v695, %v773
        %v775 = vpop.f32.mrf.mxu0
        %776 = vmatprep.mubr.f32.mxu0 0.0
        %777 = vmatmul.mubr.f32.gmra.mxu0 %v440
        %v778 = vpop.f32.mrf.mxu0
        %v779 = vadd.f32 %v695, %v778
        %v780 = vpop.f32.mrf.mxu0
        %781 = vmatprep.mubr.f32.mxu0 0.0
        %782 = vmatmul.mubr.f32.gmra.mxu0 %v443
        %v783 = vpop.f32.mrf.mxu0
        %v784 = vadd.f32 %v695, %v783
        %v785 = vpop.f32.mrf.mxu0
        %786 = vmatprep.mubr.f32.mxu0 0.0
        %787 = vmatmul.mubr.f32.gmra.mxu0 %v446
        %v788 = vpop.f32.mrf.mxu0
        %v789 = vadd.f32 %v695, %v788
        %v790 = vpop.f32.mrf.mxu0
        %791 = vmatprep.mubr.f32.mxu0 0.0
        %792 = vmatmul.mubr.f32.gmra.mxu0 %v449
        %v793 = vpop.f32.mrf.mxu0
        %v794 = vadd.f32 %v695, %v793
        %v795 = vpop.f32.mrf.mxu0
        %796 = vmatprep.mubr.f32.mxu0 0.0
        %797 = vmatmul.mubr.f32.gmra.mxu0 %v452
        %v798 = vpop.f32.mrf.mxu0
        %v799 = vadd.f32 %v695, %v798
        %v800 = vpop.f32.mrf.mxu0
        %801 = vdwg.mxu0
        %v802 = vmax.f32 %v764, 0.0
        %v803 = vmax.f32 %v769, 0.0
        %v804 = vmax.f32 %v774, 0.0
        %v805 = vmax.f32 %v779, 0.0
        %v806 = vmax.f32 %v784, 0.0
        %v807 = vmax.f32 %v789, 0.0
        %v808 = vmax.f32 %v794, 0.0
        %v809 = vmax.f32 %v799, 0.0
        %s810 = scalar_lea.vmem [#allocation7], 256
        %v811 = vld [vmem:[%s810] sm:$0xff]
        %v812 = vld [vmem:[%s810 + $0x8] sm:$0xff]
        %v813 = vld [vmem:[%s810 + $0x10] sm:$0xff]
        %v814 = vld [vmem:[%s810 + $0x18] sm:$0xff]
        %v815 = vld [vmem:[%s810 + $0x20] sm:$0xff]
        %v816 = vld [vmem:[%s810 + $0x28] sm:$0xff]
        %v817 = vld [vmem:[%s810 + $0x30] sm:$0xff]
        %v818 = vld [vmem:[%s810 + $0x38] sm:$0xff]
        %v819 = vld [vmem:[%s810 + $0x40] sm:$0xff]
        %v820 = vld [vmem:[%s810 + $0x48] sm:$0xff]
        %v821 = vld [vmem:[%s810 + $0x50] sm:$0xff]
        %v822 = vld [vmem:[%s810 + $0x58] sm:$0xff]
        %v823 = vld [vmem:[%s810 + $0x60] sm:$0xff]
        %v824 = vld [vmem:[%s810 + $0x68] sm:$0xff]
        %v825 = vld [vmem:[%s810 + $0x70] sm:$0xff]
        %v826 = vld [vmem:[%s810 + $0x78] sm:$0xff]
        %827 = vmatprep.subr.mxu0 0.0
        %828 = vmatpush1.msra.mxu0 %v826
        %829 = vmatprep.subr.mxu0 0.0
        %830 = vmatpush1.msra.mxu0 %v825
        %831 = vmatprep.subr.mxu0 0.0
        %832 = vmatpush1.msra.mxu0 %v824
        %833 = vmatprep.subr.mxu0 0.0
        %834 = vmatpush1.msra.mxu0 %v823
        %835 = vmatprep.subr.mxu0 0.0
        %836 = vmatpush1.msra.mxu0 %v822
        %837 = vmatprep.subr.mxu0 0.0
        %838 = vmatpush1.msra.mxu0 %v821
        %839 = vmatprep.subr.mxu0 0.0
        %840 = vmatpush1.msra.mxu0 %v820
        %841 = vmatprep.subr.mxu0 0.0
        %842 = vmatpush1.msra.mxu0 %v819
        %843 = vmatprep.subr.mxu0 0.0
        %844 = vmatpush1.msra.mxu0 %v818
        %845 = vmatprep.subr.mxu0 0.0
        %846 = vmatpush1.msra.mxu0 %v817
        %847 = vmatprep.subr.mxu0 0.0
        %848 = vmatpush1.msra.mxu0 %v816
        %849 = vmatprep.subr.mxu0 0.0
        %850 = vmatpush1.msra.mxu0 %v815
        %851 = vmatprep.subr.mxu0 0.0
        %852 = vmatpush1.msra.mxu0 %v814
        %853 = vmatprep.subr.mxu0 0.0
        %854 = vmatpush1.msra.mxu0 %v813
        %855 = vmatprep.subr.mxu0 0.0
        %856 = vmatpush1.msra.mxu0 %v812
        %857 = vmatprep.subr.mxu0 0.0
        %858 = vmatpush1.msra.mxu0 %v811
        %859 = vmatprep.subr.mxu0 0.0
        %860 = vmatpush2.msra.mxu0 0.0
        %861 = vmatprep.subr.mxu0 0.0
        %862 = vmatpush2.msra.mxu0 0.0
        %863 = vmatprep.subr.mxu0 0.0
        %864 = vmatpush2.msra.mxu0 0.0
        %865 = vmatprep.subr.mxu0 0.0
        %866 = vmatpush2.msra.mxu0 0.0
        %867 = vmatprep.subr.mxu0 0.0
        %868 = vmatpush2.msra.mxu0 0.0
        %869 = vmatprep.subr.mxu0 0.0
        %870 = vmatpush2.msra.mxu0 0.0
        %871 = vmatprep.subr.mxu0 0.0
        %872 = vmatpush2.msra.mxu0 0.0
        %873 = vmatprep.subr.mxu0 0.0
        %874 = vmatpush2.msra.mxu0 0.0
        %875 = vmatprep.subr.mxu0 0.0
        %876 = vmatpush2.msra.mxu0 0.0
        %877 = vmatprep.subr.mxu0 0.0
        %878 = vmatpush2.msra.mxu0 0.0
        %879 = vmatprep.subr.mxu0 0.0
        %880 = vmatpush2.msra.mxu0 0.0
        %881 = vmatprep.subr.mxu0 0.0
        %882 = vmatpush2.msra.mxu0 0.0
        %883 = vmatprep.subr.mxu0 0.0
        %884 = vmatpush2.msra.mxu0 0.0
        %885 = vmatprep.subr.mxu0 0.0
        %886 = vmatpush2.msra.mxu0 0.0
        %887 = vmatprep.subr.mxu0 0.0
        %888 = vmatpush2.msra.mxu0 0.0
        %889 = vmatprep.subr.mxu0 0.0
        %890 = vmatpush2.msra.mxu0 0.0
        %891 = vmatprep.mubr.f32.mxu0 0.0
        %892 = vmatmul.mubr.f32.gmra.mxu0 %v802
        %v893 = vpop.f32.mrf.mxu0
        %v894 = vadd.f32 0.0, %v893
        %v895 = vpop.f32.mrf.mxu0
        %896 = vmatprep.mubr.f32.mxu0 0.0
        %897 = vmatmul.mubr.f32.gmra.mxu0 %v803
        %v898 = vpop.f32.mrf.mxu0
        %v899 = vadd.f32 0.0, %v898
        %v900 = vpop.f32.mrf.mxu0
        %901 = vmatprep.mubr.f32.mxu0 0.0
        %902 = vmatmul.mubr.f32.gmra.mxu0 %v804
        %v903 = vpop.f32.mrf.mxu0
        %v904 = vadd.f32 0.0, %v903
        %v905 = vpop.f32.mrf.mxu0
        %906 = vmatprep.mubr.f32.mxu0 0.0
        %907 = vmatmul.mubr.f32.gmra.mxu0 %v805
        %v908 = vpop.f32.mrf.mxu0
        %v909 = vadd.f32 0.0, %v908
        %v910 = vpop.f32.mrf.mxu0
        %911 = vmatprep.mubr.f32.mxu0 0.0
        %912 = vmatmul.mubr.f32.gmra.mxu0 %v806
        %v913 = vpop.f32.mrf.mxu0
        %v914 = vadd.f32 0.0, %v913
        %v915 = vpop.f32.mrf.mxu0
        %916 = vmatprep.mubr.f32.mxu0 0.0
        %917 = vmatmul.mubr.f32.gmra.mxu0 %v807
        %v918 = vpop.f32.mrf.mxu0
        %v919 = vadd.f32 0.0, %v918
        %v920 = vpop.f32.mrf.mxu0
        %921 = vmatprep.mubr.f32.mxu0 0.0
        %922 = vmatmul.mubr.f32.gmra.mxu0 %v808
        %v923 = vpop.f32.mrf.mxu0
        %v924 = vadd.f32 0.0, %v923
        %v925 = vpop.f32.mrf.mxu0
        %926 = vmatprep.mubr.f32.mxu0 0.0
        %927 = vmatmul.mubr.f32.gmra.mxu0 %v809
        %v928 = vpop.f32.mrf.mxu0
        %v929 = vadd.f32 0.0, %v928
        %v930 = vpop.f32.mrf.mxu0
        %931 = vdwg.mxu0
        %s932 = scalar_lea.vmem [#allocation8], 2
        %v933 = vld [vmem:[%s932] sm:$0x1]
        %v935 = vlaneseq
        %v936 = vshrl.u32 %v935, 7
        %v937 = vsub.s32 0, %v936
        %v938 = vrot.slane %v933, %v937
        %940 = vmatprep.subr.mxu0 0.0
        %941 = vmatpush1.msra.mxu0 0.0
        %942 = vmatprep.subr.mxu0 0.0
        %943 = vmatpush1.msra.mxu0 0.0
        %944 = vmatprep.subr.mxu0 0.0
        %945 = vmatpush1.msra.mxu0 0.0
        %946 = vmatprep.subr.mxu0 0.0
        %947 = vmatpush1.msra.mxu0 0.0
        %948 = vmatprep.subr.mxu0 0.0
        %949 = vmatpush1.msra.mxu0 0.0
        %950 = vmatprep.subr.mxu0 0.0
        %951 = vmatpush1.msra.mxu0 0.0
        %952 = vmatprep.subr.mxu0 0.0
        %953 = vmatpush1.msra.mxu0 0.0
        %954 = vmatprep.subr.mxu0 0.0
        %955 = vmatpush1.msra.mxu0 0.0
        %956 = vmatprep.subr.mxu0 0.0
        %957 = vmatpush1.msra.mxu0 %v929
        %958 = vmatprep.subr.mxu0 0.0
        %959 = vmatpush1.msra.mxu0 %v924
        %960 = vmatprep.subr.mxu0 0.0
        %961 = vmatpush1.msra.mxu0 %v919
        %962 = vmatprep.subr.mxu0 0.0
        %963 = vmatpush1.msra.mxu0 %v914
        %964 = vmatprep.subr.mxu0 0.0
        %965 = vmatpush1.msra.mxu0 %v909
        %966 = vmatprep.subr.mxu0 0.0
        %967 = vmatpush1.msra.mxu0 %v904
        %968 = vmatprep.subr.mxu0 0.0
        %969 = vmatpush1.msra.mxu0 %v899
        %970 = vmatprep.subr.mxu0 0.0
        %971 = vmatpush1.msra.mxu0 %v894
        %972 = vmatprep.subr.mxu0 0.0
        %973 = vmatpush2.msra.mxu0 0.0
        %974 = vmatprep.subr.mxu0 0.0
        %975 = vmatpush2.msra.mxu0 0.0
        %976 = vmatprep.subr.mxu0 0.0
        %977 = vmatpush2.msra.mxu0 0.0
        %978 = vmatprep.subr.mxu0 0.0
        %979 = vmatpush2.msra.mxu0 0.0
        %980 = vmatprep.subr.mxu0 0.0
        %981 = vmatpush2.msra.mxu0 0.0
        %982 = vmatprep.subr.mxu0 0.0
        %983 = vmatpush2.msra.mxu0 0.0
        %984 = vmatprep.subr.mxu0 0.0
        %985 = vmatpush2.msra.mxu0 0.0
        %986 = vmatprep.subr.mxu0 0.0
        %987 = vmatpush2.msra.mxu0 0.0
        %988 = vmatprep.subr.mxu0 0.0
        %989 = vmatpush2.msra.mxu0 0.0
        %990 = vmatprep.subr.mxu0 0.0
        %991 = vmatpush2.msra.mxu0 0.0
        %992 = vmatprep.subr.mxu0 0.0
        %993 = vmatpush2.msra.mxu0 0.0
        %994 = vmatprep.subr.mxu0 0.0
        %995 = vmatpush2.msra.mxu0 0.0
        %996 = vmatprep.subr.mxu0 0.0
        %997 = vmatpush2.msra.mxu0 0.0
        %998 = vmatprep.subr.mxu0 0.0
        %999 = vmatpush2.msra.mxu0 0.0
        %1000 = vmatprep.subr.mxu0 0.0
        %1001 = vmatpush2.msra.mxu0 0.0
        %1002 = vmatprep.subr.mxu0 0.0
        %1003 = vmatpush2.msra.mxu0 0.0
        %1004 = vmatprep.mubr.f32.mxu0 0.0
        %1005 = vmatmul.mubr.f32.gmra.mxu0 %v431
        %v1006 = vpop.f32.mrf.mxu0
        %v1007 = vadd.f32 %v938, %v1006
        %v1008 = vpop.f32.mrf.mxu0
        %1009 = vmatprep.mubr.f32.mxu0 0.0
        %1010 = vmatmul.mubr.f32.gmra.mxu0 %v434
        %v1011 = vpop.f32.mrf.mxu0
        %v1012 = vadd.f32 %v938, %v1011
        %v1013 = vpop.f32.mrf.mxu0
        %1014 = vmatprep.mubr.f32.mxu0 0.0
        %1015 = vmatmul.mubr.f32.gmra.mxu0 %v437
        %v1016 = vpop.f32.mrf.mxu0
        %v1017 = vadd.f32 %v938, %v1016
        %v1018 = vpop.f32.mrf.mxu0
        %1019 = vmatprep.mubr.f32.mxu0 0.0
        %1020 = vmatmul.mubr.f32.gmra.mxu0 %v440
        %v1021 = vpop.f32.mrf.mxu0
        %v1022 = vadd.f32 %v938, %v1021
        %v1023 = vpop.f32.mrf.mxu0
        %1024 = vmatprep.mubr.f32.mxu0 0.0
        %1025 = vmatmul.mubr.f32.gmra.mxu0 %v443
        %v1026 = vpop.f32.mrf.mxu0
        %v1027 = vadd.f32 %v938, %v1026
        %v1028 = vpop.f32.mrf.mxu0
        %1029 = vmatprep.mubr.f32.mxu0 0.0
        %1030 = vmatmul.mubr.f32.gmra.mxu0 %v446
        %v1031 = vpop.f32.mrf.mxu0
        %v1032 = vadd.f32 %v938, %v1031
        %v1033 = vpop.f32.mrf.mxu0
        %1034 = vmatprep.mubr.f32.mxu0 0.0
        %1035 = vmatmul.mubr.f32.gmra.mxu0 %v449
        %v1036 = vpop.f32.mrf.mxu0
        %v1037 = vadd.f32 %v938, %v1036
        %v1038 = vpop.f32.mrf.mxu0
        %1039 = vmatprep.mubr.f32.mxu0 0.0
        %1040 = vmatmul.mubr.f32.gmra.mxu0 %v452
        %v1041 = vpop.f32.mrf.mxu0
        %v1042 = vadd.f32 %v938, %v1041
        %v1043 = vpop.f32.mrf.mxu0
        %1044 = vdwg.mxu0
        %v1045 = vmax.f32 %v1007, 0.0
        %v1046 = vmax.f32 %v1012, 0.0
        %v1047 = vmax.f32 %v1017, 0.0
        %v1048 = vmax.f32 %v1022, 0.0
        %v1049 = vmax.f32 %v1027, 0.0
        %v1050 = vmax.f32 %v1032, 0.0
        %v1051 = vmax.f32 %v1037, 0.0
        %v1052 = vmax.f32 %v1042, 0.0
        %s1053 = scalar_lea.vmem [#allocation7], 384
        %v1054 = vld [vmem:[%s1053] sm:$0xff]
        %v1055 = vld [vmem:[%s1053 + $0x8] sm:$0xff]
        %v1056 = vld [vmem:[%s1053 + $0x10] sm:$0xff]
        %v1057 = vld [vmem:[%s1053 + $0x18] sm:$0xff]
        %v1058 = vld [vmem:[%s1053 + $0x20] sm:$0xff]
        %v1059 = vld [vmem:[%s1053 + $0x28] sm:$0xff]
        %v1060 = vld [vmem:[%s1053 + $0x30] sm:$0xff]
        %v1061 = vld [vmem:[%s1053 + $0x38] sm:$0xff]
        %v1062 = vld [vmem:[%s1053 + $0x40] sm:$0xff]
        %v1063 = vld [vmem:[%s1053 + $0x48] sm:$0xff]
        %v1064 = vld [vmem:[%s1053 + $0x50] sm:$0xff]
        %v1065 = vld [vmem:[%s1053 + $0x58] sm:$0xff]
        %v1066 = vld [vmem:[%s1053 + $0x60] sm:$0xff]
        %v1067 = vld [vmem:[%s1053 + $0x68] sm:$0xff]
        %v1068 = vld [vmem:[%s1053 + $0x70] sm:$0xff]
        %v1069 = vld [vmem:[%s1053 + $0x78] sm:$0xff]
        %s1070 = scalar_lea.vmem [#allocation8], 3
        %v1071 = vld [vmem:[%s1070] sm:$0x1]
        %v1073 = vlaneseq
        %v1074 = vshrl.u32 %v1073, 7
        %v1075 = vsub.s32 0, %v1074
        %v1076 = vrot.slane %v1071, %v1075
        %1078 = vmatprep.subr.mxu0 0.0
        %1079 = vmatpush1.msra.mxu0 %v1069
        %1080 = vmatprep.subr.mxu0 0.0
        %1081 = vmatpush1.msra.mxu0 %v1068
        %1082 = vmatprep.subr.mxu0 0.0
        %1083 = vmatpush1.msra.mxu0 %v1067
        %1084 = vmatprep.subr.mxu0 0.0
        %1085 = vmatpush1.msra.mxu0 %v1066
        %1086 = vmatprep.subr.mxu0 0.0
        %1087 = vmatpush1.msra.mxu0 %v1065
        %1088 = vmatprep.subr.mxu0 0.0
        %1089 = vmatpush1.msra.mxu0 %v1064
        %1090 = vmatprep.subr.mxu0 0.0
        %1091 = vmatpush1.msra.mxu0 %v1063
        %1092 = vmatprep.subr.mxu0 0.0
        %1093 = vmatpush1.msra.mxu0 %v1062
        %1094 = vmatprep.subr.mxu0 0.0
        %1095 = vmatpush1.msra.mxu0 %v1061
        %1096 = vmatprep.subr.mxu0 0.0
        %1097 = vmatpush1.msra.mxu0 %v1060
        %1098 = vmatprep.subr.mxu0 0.0
        %1099 = vmatpush1.msra.mxu0 %v1059
        %1100 = vmatprep.subr.mxu0 0.0
        %1101 = vmatpush1.msra.mxu0 %v1058
        %1102 = vmatprep.subr.mxu0 0.0
        %1103 = vmatpush1.msra.mxu0 %v1057
        %1104 = vmatprep.subr.mxu0 0.0
        %1105 = vmatpush1.msra.mxu0 %v1056
        %1106 = vmatprep.subr.mxu0 0.0
        %1107 = vmatpush1.msra.mxu0 %v1055
        %1108 = vmatprep.subr.mxu0 0.0
        %1109 = vmatpush1.msra.mxu0 %v1054
        %1110 = vmatprep.subr.mxu0 0.0
        %1111 = vmatpush2.msra.mxu0 0.0
        %1112 = vmatprep.subr.mxu0 0.0
        %1113 = vmatpush2.msra.mxu0 0.0
        %1114 = vmatprep.subr.mxu0 0.0
        %1115 = vmatpush2.msra.mxu0 0.0
        %1116 = vmatprep.subr.mxu0 0.0
        %1117 = vmatpush2.msra.mxu0 0.0
        %1118 = vmatprep.subr.mxu0 0.0
        %1119 = vmatpush2.msra.mxu0 0.0
        %1120 = vmatprep.subr.mxu0 0.0
        %1121 = vmatpush2.msra.mxu0 0.0
        %1122 = vmatprep.subr.mxu0 0.0
        %1123 = vmatpush2.msra.mxu0 0.0
        %1124 = vmatprep.subr.mxu0 0.0
        %1125 = vmatpush2.msra.mxu0 0.0
        %1126 = vmatprep.subr.mxu0 0.0
        %1127 = vmatpush2.msra.mxu0 0.0
        %1128 = vmatprep.subr.mxu0 0.0
        %1129 = vmatpush2.msra.mxu0 0.0
        %1130 = vmatprep.subr.mxu0 0.0
        %1131 = vmatpush2.msra.mxu0 0.0
        %1132 = vmatprep.subr.mxu0 0.0
        %1133 = vmatpush2.msra.mxu0 0.0
        %1134 = vmatprep.subr.mxu0 0.0
        %1135 = vmatpush2.msra.mxu0 0.0
        %1136 = vmatprep.subr.mxu0 0.0
        %1137 = vmatpush2.msra.mxu0 0.0
        %1138 = vmatprep.subr.mxu0 0.0
        %1139 = vmatpush2.msra.mxu0 0.0
        %1140 = vmatprep.subr.mxu0 0.0
        %1141 = vmatpush2.msra.mxu0 0.0
        %1142 = vmatprep.mubr.f32.mxu0 0.0
        %1143 = vmatmul.mubr.f32.gmra.mxu0 %v1045
        %v1144 = vpop.f32.mrf.mxu0
        %v1145 = vadd.f32 %v1076, %v1144
        %v1146 = vpop.f32.mrf.mxu0
        %1147 = vmatprep.mubr.f32.mxu0 0.0
        %1148 = vmatmul.mubr.f32.gmra.mxu0 %v1046
        %v1149 = vpop.f32.mrf.mxu0
        %v1150 = vadd.f32 %v1076, %v1149
        %v1151 = vpop.f32.mrf.mxu0
        %1152 = vmatprep.mubr.f32.mxu0 0.0
        %1153 = vmatmul.mubr.f32.gmra.mxu0 %v1047
        %v1154 = vpop.f32.mrf.mxu0
        %v1155 = vadd.f32 %v1076, %v1154
        %v1156 = vpop.f32.mrf.mxu0
        %1157 = vmatprep.mubr.f32.mxu0 0.0
        %1158 = vmatmul.mubr.f32.gmra.mxu0 %v1048
        %v1159 = vpop.f32.mrf.mxu0
        %v1160 = vadd.f32 %v1076, %v1159
        %v1161 = vpop.f32.mrf.mxu0
        %1162 = vmatprep.mubr.f32.mxu0 0.0
        %1163 = vmatmul.mubr.f32.gmra.mxu0 %v1049
        %v1164 = vpop.f32.mrf.mxu0
        %v1165 = vadd.f32 %v1076, %v1164
        %v1166 = vpop.f32.mrf.mxu0
        %1167 = vmatprep.mubr.f32.mxu0 0.0
        %1168 = vmatmul.mubr.f32.gmra.mxu0 %v1050
        %v1169 = vpop.f32.mrf.mxu0
        %v1170 = vadd.f32 %v1076, %v1169
        %v1171 = vpop.f32.mrf.mxu0
        %1172 = vmatprep.mubr.f32.mxu0 0.0
        %1173 = vmatmul.mubr.f32.gmra.mxu0 %v1051
        %v1174 = vpop.f32.mrf.mxu0
        %v1175 = vadd.f32 %v1076, %v1174
        %v1176 = vpop.f32.mrf.mxu0
        %1177 = vmatprep.mubr.f32.mxu0 0.0
        %1178 = vmatmul.mubr.f32.gmra.mxu0 %v1052
        %v1179 = vpop.f32.mrf.mxu0
        %v1180 = vadd.f32 %v1076, %v1179
        %v1181 = vpop.f32.mrf.mxu0
        %1182 = vdwg.mxu0
        %v1183 = vmax.f32 %v1145, 0.0
        %v1184 = vmax.f32 %v1150, 0.0
        %v1185 = vmax.f32 %v1155, 0.0
        %v1186 = vmax.f32 %v1160, 0.0
        %v1187 = vmax.f32 %v1165, 0.0
        %v1188 = vmax.f32 %v1170, 0.0
        %v1189 = vmax.f32 %v1175, 0.0
        %v1190 = vmax.f32 %v1180, 0.0
        %s1191 = scalar_lea.vmem [#allocation7], 512
        %v1192 = vld [vmem:[%s1191] sm:$0xff]
        %v1193 = vld [vmem:[%s1191 + $0x8] sm:$0xff]
        %v1194 = vld [vmem:[%s1191 + $0x10] sm:$0xff]
        %v1195 = vld [vmem:[%s1191 + $0x18] sm:$0xff]
        %v1196 = vld [vmem:[%s1191 + $0x20] sm:$0xff]
        %v1197 = vld [vmem:[%s1191 + $0x28] sm:$0xff]
        %v1198 = vld [vmem:[%s1191 + $0x30] sm:$0xff]
        %v1199 = vld [vmem:[%s1191 + $0x38] sm:$0xff]
        %v1200 = vld [vmem:[%s1191 + $0x40] sm:$0xff]
        %v1201 = vld [vmem:[%s1191 + $0x48] sm:$0xff]
        %v1202 = vld [vmem:[%s1191 + $0x50] sm:$0xff]
        %v1203 = vld [vmem:[%s1191 + $0x58] sm:$0xff]
        %v1204 = vld [vmem:[%s1191 + $0x60] sm:$0xff]
        %v1205 = vld [vmem:[%s1191 + $0x68] sm:$0xff]
        %v1206 = vld [vmem:[%s1191 + $0x70] sm:$0xff]
        %v1207 = vld [vmem:[%s1191 + $0x78] sm:$0xff]
        %s1208 = scalar_lea.vmem [#allocation8], 4
        %v1209 = vld [vmem:[%s1208] sm:$0x1]
        %v1211 = vlaneseq
        %v1212 = vshrl.u32 %v1211, 7
        %v1213 = vsub.s32 0, %v1212
        %v1214 = vrot.slane %v1209, %v1213
        %1216 = vmatprep.subr.mxu0 0.0
        %1217 = vmatpush1.msra.mxu0 %v1207
        %1218 = vmatprep.subr.mxu0 0.0
        %1219 = vmatpush1.msra.mxu0 %v1206
        %1220 = vmatprep.subr.mxu0 0.0
        %1221 = vmatpush1.msra.mxu0 %v1205
        %1222 = vmatprep.subr.mxu0 0.0
        %1223 = vmatpush1.msra.mxu0 %v1204
        %1224 = vmatprep.subr.mxu0 0.0
        %1225 = vmatpush1.msra.mxu0 %v1203
        %1226 = vmatprep.subr.mxu0 0.0
        %1227 = vmatpush1.msra.mxu0 %v1202
        %1228 = vmatprep.subr.mxu0 0.0
        %1229 = vmatpush1.msra.mxu0 %v1201
        %1230 = vmatprep.subr.mxu0 0.0
        %1231 = vmatpush1.msra.mxu0 %v1200
        %1232 = vmatprep.subr.mxu0 0.0
        %1233 = vmatpush1.msra.mxu0 %v1199
        %1234 = vmatprep.subr.mxu0 0.0
        %1235 = vmatpush1.msra.mxu0 %v1198
        %1236 = vmatprep.subr.mxu0 0.0
        %1237 = vmatpush1.msra.mxu0 %v1197
        %1238 = vmatprep.subr.mxu0 0.0
        %1239 = vmatpush1.msra.mxu0 %v1196
        %1240 = vmatprep.subr.mxu0 0.0
        %1241 = vmatpush1.msra.mxu0 %v1195
        %1242 = vmatprep.subr.mxu0 0.0
        %1243 = vmatpush1.msra.mxu0 %v1194
        %1244 = vmatprep.subr.mxu0 0.0
        %1245 = vmatpush1.msra.mxu0 %v1193
        %1246 = vmatprep.subr.mxu0 0.0
        %1247 = vmatpush1.msra.mxu0 %v1192
        %1248 = vmatprep.subr.mxu0 0.0
        %1249 = vmatpush2.msra.mxu0 0.0
        %1250 = vmatprep.subr.mxu0 0.0
        %1251 = vmatpush2.msra.mxu0 0.0
        %1252 = vmatprep.subr.mxu0 0.0
        %1253 = vmatpush2.msra.mxu0 0.0
        %1254 = vmatprep.subr.mxu0 0.0
        %1255 = vmatpush2.msra.mxu0 0.0
        %1256 = vmatprep.subr.mxu0 0.0
        %1257 = vmatpush2.msra.mxu0 0.0
        %1258 = vmatprep.subr.mxu0 0.0
        %1259 = vmatpush2.msra.mxu0 0.0
        %1260 = vmatprep.subr.mxu0 0.0
        %1261 = vmatpush2.msra.mxu0 0.0
        %1262 = vmatprep.subr.mxu0 0.0
        %1263 = vmatpush2.msra.mxu0 0.0
        %1264 = vmatprep.subr.mxu0 0.0
        %1265 = vmatpush2.msra.mxu0 0.0
        %1266 = vmatprep.subr.mxu0 0.0
        %1267 = vmatpush2.msra.mxu0 0.0
        %1268 = vmatprep.subr.mxu0 0.0
        %1269 = vmatpush2.msra.mxu0 0.0
        %1270 = vmatprep.subr.mxu0 0.0
        %1271 = vmatpush2.msra.mxu0 0.0
        %1272 = vmatprep.subr.mxu0 0.0
        %1273 = vmatpush2.msra.mxu0 0.0
        %1274 = vmatprep.subr.mxu0 0.0
        %1275 = vmatpush2.msra.mxu0 0.0
        %1276 = vmatprep.subr.mxu0 0.0
        %1277 = vmatpush2.msra.mxu0 0.0
        %1278 = vmatprep.subr.mxu0 0.0
        %1279 = vmatpush2.msra.mxu0 0.0
        %1280 = vmatprep.mubr.f32.mxu0 0.0
        %1281 = vmatmul.mubr.f32.gmra.mxu0 %v1183
        %v1282 = vpop.f32.mrf.mxu0
        %v1283 = vadd.f32 %v1214, %v1282
        %v1284 = vpop.f32.mrf.mxu0
        %1285 = vmatprep.mubr.f32.mxu0 0.0
        %1286 = vmatmul.mubr.f32.gmra.mxu0 %v1184
        %v1287 = vpop.f32.mrf.mxu0
        %v1288 = vadd.f32 %v1214, %v1287
        %v1289 = vpop.f32.mrf.mxu0
        %1290 = vmatprep.mubr.f32.mxu0 0.0
        %1291 = vmatmul.mubr.f32.gmra.mxu0 %v1185
        %v1292 = vpop.f32.mrf.mxu0
        %v1293 = vadd.f32 %v1214, %v1292
        %v1294 = vpop.f32.mrf.mxu0
        %1295 = vmatprep.mubr.f32.mxu0 0.0
        %1296 = vmatmul.mubr.f32.gmra.mxu0 %v1186
        %v1297 = vpop.f32.mrf.mxu0
        %v1298 = vadd.f32 %v1214, %v1297
        %v1299 = vpop.f32.mrf.mxu0
        %1300 = vmatprep.mubr.f32.mxu0 0.0
        %1301 = vmatmul.mubr.f32.gmra.mxu0 %v1187
        %v1302 = vpop.f32.mrf.mxu0
        %v1303 = vadd.f32 %v1214, %v1302
        %v1304 = vpop.f32.mrf.mxu0
        %1305 = vmatprep.mubr.f32.mxu0 0.0
        %1306 = vmatmul.mubr.f32.gmra.mxu0 %v1188
        %v1307 = vpop.f32.mrf.mxu0
        %v1308 = vadd.f32 %v1214, %v1307
        %v1309 = vpop.f32.mrf.mxu0
        %1310 = vmatprep.mubr.f32.mxu0 0.0
        %1311 = vmatmul.mubr.f32.gmra.mxu0 %v1189
        %v1312 = vpop.f32.mrf.mxu0
        %v1313 = vadd.f32 %v1214, %v1312
        %v1314 = vpop.f32.mrf.mxu0
        %1315 = vmatprep.mubr.f32.mxu0 0.0
        %1316 = vmatmul.mubr.f32.gmra.mxu0 %v1190
        %v1317 = vpop.f32.mrf.mxu0
        %v1318 = vadd.f32 %v1214, %v1317
        %v1319 = vpop.f32.mrf.mxu0
        %1320 = vdwg.mxu0
        %v1321 = vmax.f32 %v1283, 0.0
        %v1322 = vmax.f32 %v1288, 0.0
        %v1323 = vmax.f32 %v1293, 0.0
        %v1324 = vmax.f32 %v1298, 0.0
        %v1325 = vmax.f32 %v1303, 0.0
        %v1326 = vmax.f32 %v1308, 0.0
        %v1327 = vmax.f32 %v1313, 0.0
        %v1328 = vmax.f32 %v1318, 0.0
        %s1329 = scalar_lea.vmem [#allocation7], 640
        %v1330 = vld [vmem:[%s1329] sm:$0xff]
        %v1331 = vld [vmem:[%s1329 + $0x8] sm:$0xff]
        %v1332 = vld [vmem:[%s1329 + $0x10] sm:$0xff]
        %v1333 = vld [vmem:[%s1329 + $0x18] sm:$0xff]
        %v1334 = vld [vmem:[%s1329 + $0x20] sm:$0xff]
        %v1335 = vld [vmem:[%s1329 + $0x28] sm:$0xff]
        %v1336 = vld [vmem:[%s1329 + $0x30] sm:$0xff]
        %v1337 = vld [vmem:[%s1329 + $0x38] sm:$0xff]
        %v1338 = vld [vmem:[%s1329 + $0x40] sm:$0xff]
        %v1339 = vld [vmem:[%s1329 + $0x48] sm:$0xff]
        %v1340 = vld [vmem:[%s1329 + $0x50] sm:$0xff]
        %v1341 = vld [vmem:[%s1329 + $0x58] sm:$0xff]
        %v1342 = vld [vmem:[%s1329 + $0x60] sm:$0xff]
        %v1343 = vld [vmem:[%s1329 + $0x68] sm:$0xff]
        %v1344 = vld [vmem:[%s1329 + $0x70] sm:$0xff]
        %v1345 = vld [vmem:[%s1329 + $0x78] sm:$0xff]
        %s1346 = scalar_lea.vmem [#allocation8], 5
        %v1347 = vld [vmem:[%s1346] sm:$0x1]
        %v1349 = vlaneseq
        %v1350 = vshrl.u32 %v1349, 7
        %v1351 = vsub.s32 0, %v1350
        %v1352 = vrot.slane %v1347, %v1351
        %1354 = vmatprep.subr.mxu0 0.0
        %1355 = vmatpush1.msra.mxu0 %v1345
        %1356 = vmatprep.subr.mxu0 0.0
        %1357 = vmatpush1.msra.mxu0 %v1344
        %1358 = vmatprep.subr.mxu0 0.0
        %1359 = vmatpush1.msra.mxu0 %v1343
        %1360 = vmatprep.subr.mxu0 0.0
        %1361 = vmatpush1.msra.mxu0 %v1342
        %1362 = vmatprep.subr.mxu0 0.0
        %1363 = vmatpush1.msra.mxu0 %v1341
        %1364 = vmatprep.subr.mxu0 0.0
        %1365 = vmatpush1.msra.mxu0 %v1340
        %1366 = vmatprep.subr.mxu0 0.0
        %1367 = vmatpush1.msra.mxu0 %v1339
        %1368 = vmatprep.subr.mxu0 0.0
        %1369 = vmatpush1.msra.mxu0 %v1338
        %1370 = vmatprep.subr.mxu0 0.0
        %1371 = vmatpush1.msra.mxu0 %v1337
        %1372 = vmatprep.subr.mxu0 0.0
        %1373 = vmatpush1.msra.mxu0 %v1336
        %1374 = vmatprep.subr.mxu0 0.0
        %1375 = vmatpush1.msra.mxu0 %v1335
        %1376 = vmatprep.subr.mxu0 0.0
        %1377 = vmatpush1.msra.mxu0 %v1334
        %1378 = vmatprep.subr.mxu0 0.0
        %1379 = vmatpush1.msra.mxu0 %v1333
        %1380 = vmatprep.subr.mxu0 0.0
        %1381 = vmatpush1.msra.mxu0 %v1332
        %1382 = vmatprep.subr.mxu0 0.0
        %1383 = vmatpush1.msra.mxu0 %v1331
        %1384 = vmatprep.subr.mxu0 0.0
        %1385 = vmatpush1.msra.mxu0 %v1330
        %1386 = vmatprep.subr.mxu0 0.0
        %1387 = vmatpush2.msra.mxu0 0.0
        %1388 = vmatprep.subr.mxu0 0.0
        %1389 = vmatpush2.msra.mxu0 0.0
        %1390 = vmatprep.subr.mxu0 0.0
        %1391 = vmatpush2.msra.mxu0 0.0
        %1392 = vmatprep.subr.mxu0 0.0
        %1393 = vmatpush2.msra.mxu0 0.0
        %1394 = vmatprep.subr.mxu0 0.0
        %1395 = vmatpush2.msra.mxu0 0.0
        %1396 = vmatprep.subr.mxu0 0.0
        %1397 = vmatpush2.msra.mxu0 0.0
        %1398 = vmatprep.subr.mxu0 0.0
        %1399 = vmatpush2.msra.mxu0 0.0
        %1400 = vmatprep.subr.mxu0 0.0
        %1401 = vmatpush2.msra.mxu0 0.0
        %1402 = vmatprep.subr.mxu0 0.0
        %1403 = vmatpush2.msra.mxu0 0.0
        %1404 = vmatprep.subr.mxu0 0.0
        %1405 = vmatpush2.msra.mxu0 0.0
        %1406 = vmatprep.subr.mxu0 0.0
        %1407 = vmatpush2.msra.mxu0 0.0
        %1408 = vmatprep.subr.mxu0 0.0
        %1409 = vmatpush2.msra.mxu0 0.0
        %1410 = vmatprep.subr.mxu0 0.0
        %1411 = vmatpush2.msra.mxu0 0.0
        %1412 = vmatprep.subr.mxu0 0.0
        %1413 = vmatpush2.msra.mxu0 0.0
        %1414 = vmatprep.subr.mxu0 0.0
        %1415 = vmatpush2.msra.mxu0 0.0
        %1416 = vmatprep.subr.mxu0 0.0
        %1417 = vmatpush2.msra.mxu0 0.0
        %1418 = vmatprep.mubr.f32.mxu0 0.0
        %1419 = vmatmul.mubr.f32.gmra.mxu0 %v1321
        %v1420 = vpop.f32.mrf.mxu0
        %v1421 = vadd.f32 %v1352, %v1420
        %v1422 = vpop.f32.mrf.mxu0
        %1423 = vmatprep.mubr.f32.mxu0 0.0
        %1424 = vmatmul.mubr.f32.gmra.mxu0 %v1322
        %v1425 = vpop.f32.mrf.mxu0
        %v1426 = vadd.f32 %v1352, %v1425
        %v1427 = vpop.f32.mrf.mxu0
        %1428 = vmatprep.mubr.f32.mxu0 0.0
        %1429 = vmatmul.mubr.f32.gmra.mxu0 %v1323
        %v1430 = vpop.f32.mrf.mxu0
        %v1431 = vadd.f32 %v1352, %v1430
        %v1432 = vpop.f32.mrf.mxu0
        %1433 = vmatprep.mubr.f32.mxu0 0.0
        %1434 = vmatmul.mubr.f32.gmra.mxu0 %v1324
        %v1435 = vpop.f32.mrf.mxu0
        %v1436 = vadd.f32 %v1352, %v1435
        %v1437 = vpop.f32.mrf.mxu0
        %1438 = vmatprep.mubr.f32.mxu0 0.0
        %1439 = vmatmul.mubr.f32.gmra.mxu0 %v1325
        %v1440 = vpop.f32.mrf.mxu0
        %v1441 = vadd.f32 %v1352, %v1440
        %v1442 = vpop.f32.mrf.mxu0
        %1443 = vmatprep.mubr.f32.mxu0 0.0
        %1444 = vmatmul.mubr.f32.gmra.mxu0 %v1326
        %v1445 = vpop.f32.mrf.mxu0
        %v1446 = vadd.f32 %v1352, %v1445
        %v1447 = vpop.f32.mrf.mxu0
        %1448 = vmatprep.mubr.f32.mxu0 0.0
        %1449 = vmatmul.mubr.f32.gmra.mxu0 %v1327
        %v1450 = vpop.f32.mrf.mxu0
        %v1451 = vadd.f32 %v1352, %v1450
        %v1452 = vpop.f32.mrf.mxu0
        %1453 = vmatprep.mubr.f32.mxu0 0.0
        %1454 = vmatmul.mubr.f32.gmra.mxu0 %v1328
        %v1455 = vpop.f32.mrf.mxu0
        %v1456 = vadd.f32 %v1352, %v1455
        %v1457 = vpop.f32.mrf.mxu0
        %1458 = vdwg.mxu0
        %1459 = vst [vmem:[%s284] sm:$0xff] %v1421
        %1460 = vst [vmem:[%s284 + $0x8] sm:$0xff] %v1426
        %1461 = vst [vmem:[%s284 + $0x10] sm:$0xff] %v1431
        %1462 = vst [vmem:[%s284 + $0x18] sm:$0xff] %v1436
        %1463 = vst [vmem:[%s284 + $0x20] sm:$0xff] %v1441
        %1464 = vst [vmem:[%s284 + $0x28] sm:$0xff] %v1446
        %1465 = vst [vmem:[%s284 + $0x30] sm:$0xff] %v1451
        %1466 = vst [vmem:[%s284 + $0x38] sm:$0xff] %v1456
        %s1467 = sand.u32 %s127, 1
        %s1468 = scalar_lea.sflag [#allocation4], %s1467
        %s1469 = sand.u32 %s127, 1
        %s1470 = smul.addr %s1469, 64
        %s1471 = scalar_lea.vmem [#allocation10], %s1470
        // Predicated region
        $region53: #{tpu_custom_call.1} parent=35 // pred_check
          %p1472 = pneg %p137
        $region54: #{tpu_custom_call.1} parent=35 // pred_check_branch
          %1474 = sbr.rel (%p1472) target = $region56
        $region55: #{tpu_custom_call.1} parent=35 // pred_region
          %s1476 = ssub.s32 1024, 1024
          %1477 = vsyncadd %s1468, %s1476
          %s1478 = smul.addr %s25, 8
          %s1479 = smul.addr %s1478, 128
          %s1480 = scalar_lea.hbm %s4, %s1479
          %s1481 = sshll.u32 %s1471, 4
          %s1482 = int_to_ptr.vmem [resolvable:$true] %s1481
          %1487 = dma.vmem_to_hbm [thread:$0]  %s1482, 1024, %s1480, %s1468, 128, 128, 8
        $region56: #{tpu_custom_call.1} parent=35 // pred_fallthru
          _
      $region36: #{tpu_custom_call.1} parent=5 // pred_fallthru
        _
      %p1488 = scmp.le.s32.totalorder 2, %s20
      // Predicated region
      $region57: #{tpu_custom_call.1} parent=5 // pred_check
        %p1489 = pneg %p1488
      $region58: #{tpu_custom_call.1} parent=5 // pred_check_branch
        %1491 = sbr.rel (%p1489) target = $region60
      $region59: #{tpu_custom_call.1} parent=5 // pred_region
        %s1492 = ssub.s32 %s20, 2
        // Predicated region
        $region61: #{tpu_custom_call.1} parent=59 // pred_check
          %p1493 = pneg %p143
        $region62: #{tpu_custom_call.1} parent=59 // pred_check_branch
          %1495 = sbr.rel (%p1493) target = $region64
        $region63: #{tpu_custom_call.1} parent=59 // pred_region
          %s1496 = sand.u32 %s128, 1
          %s1497 = scalar_lea.sflag [#allocation4], %s1496
          %s1498 = sand.u32 %s128, 1
          %s1499 = smul.addr %s1498, 64
          %s1500 = scalar_lea.vmem [#allocation10], %s1499
          %1501 = dma.done %s1497, 1024
        $region64: #{tpu_custom_call.1} parent=59 // pred_fallthru
          _
      $region60: #{tpu_custom_call.1} parent=5 // pred_fallthru
        _
    $region6: #{tpu_custom_call.1} parent=1 // loop_footer
      %s24 = sadd.s32 1, %s20
    $region7: #{tpu_custom_call.1} parent=1 // loop_footer_branch
      %19 = sbr.rel target = $region3
    $region8: #{tpu_custom_call.1} parent=1 // loop_exit
      _
    %1502 = vsyncpa [#allocation3], 1
    %s1503 = scalar_lea.sflag [#allocation3], 1
    %1504 = vsyncpa %s1503, 1
    %1505 = vsyncpa [#allocation6], 1
    %s1506 = scalar_lea.sflag [#allocation6], 1
    %1507 = vsyncpa %s1506, 1
    %1508 = vsyncpa [#allocation9], 1
    %1509 = vsyncpa [#allocation4], 1
    %s1510 = scalar_lea.sflag [#allocation4], 1
    %1511 = vsyncpa %s1510, 1

</llo_original>
